<compile_context>
chip_gen: v7x
topology: tpu7x:2x2x1
jax: 0.10.0
libtpu: 0.0.40
codegen_flags: <defaults>
</compile_context>

<pallas_src>
import jax
import jax.numpy as jnp
from jax.experimental import pallas as pl
from jax.experimental.pallas import tpu as pltpu

MARGIN = 4.0        # self.margin
POS_IOU_THR = 0.5
NEG_IOU_THR = 0.4
EPS = 1e-8


def _loss_head_kernel(cls_ref, reg_ref, anc_ref, annc_ref, gtf_ref, out_ref, acc_ref):
    t = pl.program_id(1)

    cls = cls_ref[0]           # (C, TA) logits: classes on sublanes, anchors on lanes
    reg = reg_ref[0]           # (4, TA) predicted deltas (dx, dy, dw, dh rows)
    anc = anc_ref[...]         # (16, TA) precomputed, batch-invariant anchor features
    annc = annc_ref[0]         # (M, 8) GT columns: x1, y1, x2, y2, label, pad...
    gtf = gtf_ref[0]           # (8, M) GT field rows: label, x1, y1, x2, y2, 0, 0, 0

    C, TA = cls.shape
    M = annc.shape[0]

    # ---- per-batch accumulator: zero on the first anchor tile ---------------
    @pl.when(t == 0)
    def _():
        acc_ref[...] = jnp.zeros_like(acc_ref)

    # ---- anchor features (hoisted to wrapper), each a (1, TA) lane row ------
    ax1 = anc[0:1]; ay1 = anc[1:2]; ax2 = anc[2:3]; ay2 = anc[3:4]
    area_a = anc[4:5]; acx = anc[5:6]; acy = anc[6:7]
    inv_aw = anc[7:8]; inv_ah = anc[8:9]
    log_aw = anc[9:10]; log_ah = anc[10:11]
    valid_a = anc[11:12]                               # 1 for real anchors, 0 for lane pad

    # ---- GT columns, each (M, 1) --------------------------------------------
    gx1 = annc[:, 0:1]; gy1 = annc[:, 1:2]; gx2 = annc[:, 2:3]; gy2 = annc[:, 3:4]
    glab_col = annc[:, 4:5]
    valid_gt = glab_col != -1.0                        # padding GT rows excluded

    # ---- assignment: pairwise IoU in (M, TA) layout (anchors on lanes) ------
    ix1 = jnp.maximum(ax1, gx1)                        # (M, TA)
    iy1 = jnp.maximum(ay1, gy1)
    ix2 = jnp.minimum(ax2, gx2)
    iy2 = jnp.minimum(ay2, gy2)
    inter = jnp.maximum(ix2 - ix1, 0.0) * jnp.maximum(iy2 - iy1, 0.0)
    area_g = (gx2 - gx1) * (gy2 - gy1)                 # (M, 1)
    # exact division (not approx reciprocal) so 0.4/0.5 threshold decisions
    # stay bit-faithful to the reference assigner.
    iou = inter / (area_a + area_g - inter + EPS)
    iou = jnp.where(valid_gt, iou, -1.0)               # invalid GTs never win

    max_iou = jnp.max(iou, axis=0, keepdims=True)      # (1, TA) sublane reduce
    iota_m = jax.lax.broadcasted_iota(jnp.int32, (M, TA), 0)
    best_idx = jnp.min(jnp.where(iou == max_iou, iota_m, M), axis=0, keepdims=True)
    onehot = (iota_m == best_idx).astype(jnp.float32)  # (M, TA) best-GT one-hot

    pos = max_iou >= POS_IOU_THR                       # assign >= 0
    ign = jnp.logical_and(max_iou >= NEG_IOU_THR,
                          jnp.logical_not(pos))        # assign == -2
    # everything else is background (assign == -1, class target 0)

    # ---- fused gather of best-GT fields: one MXU matmul (8,M)@(M,TA)->(8,TA) -
    gathered = jnp.dot(gtf, onehot, preferred_element_type=jnp.float32)
    assigned_lab = gathered[0:1]                       # (1, TA)
    bx1 = gathered[1:2]; by1 = gathered[2:3]
    bx2 = gathered[3:4]; by2 = gathered[4:5]
    # per-anchor margin = MARGIN / sqrt(w*h) of the assigned GT (EUP rsqrt)
    assigned_margin = MARGIN * jax.lax.rsqrt(
        jnp.maximum((bx2 - bx1) * (by2 - by1), EPS))

    # ---- classification: margin softmax cross-entropy -----------------------
    posf = pos.astype(jnp.float32) * valid_a
    keep = (1.0 - ign.astype(jnp.float32)) * valid_a   # clf_target != -1, real anchor
    tgt_i = jnp.where(pos, assigned_lab, 0.0).astype(jnp.int32)   # clf_target
    margin_vec = posf * assigned_margin                           # per-anchor margin

    class_iota = jax.lax.broadcasted_iota(jnp.int32, (C, TA), 0)
    onehot_c = (class_iota == tgt_i).astype(jnp.float32)          # (C, TA)
    adj = cls - margin_vec * onehot_c
    zmax = jnp.max(adj, axis=0, keepdims=True)
    z = adj - zmax
    lse = jnp.log(jnp.sum(jnp.exp(z), axis=0, keepdims=True))
    ce = lse - jnp.sum(z * onehot_c, axis=0, keepdims=True)       # (1, TA)
    ce_part = jnp.sum(ce * keep)
    keep_part = jnp.sum(keep)

    # ---- regression: smooth-L1 on box-delta encodings, positives only -------
    bw = jnp.maximum(bx2 - bx1, EPS); bh = jnp.maximum(by2 - by1, EPS)
    bcx = 0.5 * (bx1 + bx2);          bcy = 0.5 * (by1 + by2)
    tx = (bcx - acx) * inv_aw
    ty = (bcy - acy) * inv_ah
    tw = jnp.log(bw) - log_aw
    th = jnp.log(bh) - log_ah

    def sl1_sum(pred_row, tgt_row):
        d = pred_row - tgt_row
        ad = jnp.abs(d)
        s = jnp.where(ad < 1.0, 0.5 * d * d, ad - 0.5)
        return jnp.sum(posf * s)

    pos_part = jnp.sum(posf)
    reg_part = (sl1_sum(reg[0:1], tx) + sl1_sum(reg[1:2], ty)
                + sl1_sum(reg[2:3], tw) + sl1_sum(reg[3:4], th))

    # ---- accumulate partial sums into the resident lane-dense tile ----------
    lane = jax.lax.broadcasted_iota(jnp.int32, (8, 128), 1)
    sub = jax.lax.broadcasted_iota(jnp.int32, (8, 128), 0)
    row0 = sub == 0
    acc_ref[...] += jnp.where(row0 & (lane == 0), ce_part,
                    jnp.where(row0 & (lane == 1), keep_part,
                    jnp.where(row0 & (lane == 2), reg_part,
                    jnp.where(row0 & (lane == 3), pos_part, 0.0))))

    # ---- finalize on the last anchor tile: normalize + single unmasked vst --
    @pl.when(t == pl.num_programs(1) - 1)
    def _():
        acc = acc_ref[...]
        ce_sum = jnp.sum(jnp.where(row0 & (lane == 0), acc, 0.0))
        keep_sum = jnp.sum(jnp.where(row0 & (lane == 1), acc, 0.0))
        reg_sum = jnp.sum(jnp.where(row0 & (lane == 2), acc, 0.0))
        pos_sum = jnp.sum(jnp.where(row0 & (lane == 3), acc, 0.0))
        clf_loss = ce_sum / jnp.maximum(keep_sum, 1.0)
        reg_loss = reg_sum / jnp.maximum(4.0 * pos_sum, 1.0)
        out_ref[0] = jnp.where(row0 & (lane == 0), clf_loss,
                     jnp.where(row0 & (lane == 1), reg_loss,
                     jnp.where(row0 & (lane == 2), pos_sum, 0.0)))


def loss_head_forward(classifications, regressions, anchors, annotations, *,
                      anchor_tile=1024):
    """Returns (classification_losses (B,), regression_losses (B,), n (B,1))."""
    B, A, C = classifications.shape
    M = annotations.shape[1]

    # --- anchor-tile size: lane multiple of 128, never larger than padded A --
    a128 = pl.cdiv(A, 128) * 128
    ta = min(max(128, (anchor_tile // 128) * 128), a128)
    A_pad = pl.cdiv(A, ta) * ta
    n_t = A_pad // ta
    pad_a = A_pad - A

    # --- lane-orient the big streams: A on the last (lane) axis --------------
    cls_t = jnp.transpose(classifications, (0, 2, 1)).astype(jnp.float32)  # (B, C, A)
    reg_t = jnp.transpose(regressions, (0, 2, 1)).astype(jnp.float32)      # (B, 4, A)
    if pad_a:
        cls_t = jnp.pad(cls_t, ((0, 0), (0, 0), (0, pad_a)))
        reg_t = jnp.pad(reg_t, ((0, 0), (0, 0), (0, pad_a)))

    # --- batch-invariant anchor features (+ validity row), computed once -----
    anc = jnp.pad(anchors[0].astype(jnp.float32), ((0, pad_a), (0, 0)))    # (A_pad, 4)
    ax1, ay1, ax2, ay2 = anc[:, 0], anc[:, 1], anc[:, 2], anc[:, 3]
    aw = jnp.maximum(ax2 - ax1, EPS)
    ah = jnp.maximum(ay2 - ay1, EPS)
    valid_a = (jnp.arange(A_pad) < A).astype(jnp.float32)
    zeros_a = jnp.zeros_like(ax1)
    anc_feats = jnp.stack(
        [ax1, ay1, ax2, ay2,
         (ax2 - ax1) * (ay2 - ay1),                 # area
         0.5 * (ax1 + ax2), 0.5 * (ay1 + ay2),      # center
         1.0 / aw, 1.0 / ah,                        # reciprocal w/h
         jnp.log(aw), jnp.log(ah),                  # log w/h
         valid_a,                                   # anchor validity (lane padding mask)
         zeros_a, zeros_a, zeros_a, zeros_a],
        axis=0)                                                            # (16, A_pad)

    # --- tiny GT tensors in both orientations (columns for IoU broadcast,
    #     rows for the fused MXU gather) --------------------------------------
    ann = annotations.astype(jnp.float32)                                  # (B, M, 5)
    ann_cols = jnp.concatenate(
        [ann, jnp.zeros((B, M, 3), jnp.float32)], axis=-1)                 # (B, M, 8)
    zeros_bm = jnp.zeros((B, M), jnp.float32)
    gt_fields = jnp.stack(
        [ann[..., 4], ann[..., 0], ann[..., 1], ann[..., 2], ann[..., 3],
         zeros_bm, zeros_bm, zeros_bm], axis=1)                            # (B, 8, M)

    grid_spec = pltpu.PrefetchScalarGridSpec(
        num_scalar_prefetch=0,
        grid=(B, n_t),
        in_specs=[
            pl.BlockSpec((1, C, ta), lambda b, t: (b, 0, t)),
            pl.BlockSpec((1, 4, ta), lambda b, t: (b, 0, t)),
            pl.BlockSpec((16, ta), lambda b, t: (0, t)),      # batch-invariant anchors
            pl.BlockSpec((1, M, 8), lambda b, t: (b, 0, 0)),  # resident across t
            pl.BlockSpec((1, 8, M), lambda b, t: (b, 0, 0)),  # resident across t
        ],
        out_specs=pl.BlockSpec((1, 8, 128), lambda b, t: (b, 0, 0)),
        scratch_shapes=[pltpu.VMEM((8, 128), jnp.float32)],
    )
    out = pl.pallas_call(
        _loss_head_kernel,
        out_shape=jax.ShapeDtypeStruct((B, 8, 128), jnp.float32),
        grid_spec=grid_spec,
        compiler_params=pltpu.CompilerParams(
            dimension_semantics=("parallel", "arbitrary")),   # B over cores, A-tiles serial
    )(cls_t, reg_t, anc_feats, ann_cols, gt_fields)

    clf = out[:, 0, 0]
    rgl = out[:, 0, 1]
    n = out[:, 0, 2:3]
    return clf, rgl, n


if __name__ == "__main__":
    B, A, C, M = 2, 500, 8, 8     # A deliberately not a multiple of 128 to exercise padding
    key = jax.random.PRNGKey(0)
    k1, k2, k3, k4, k5, k6 = jax.random.split(key, 6)

    # annotations (B, M, 5); last 3 rows per image are padding (label = -1)
    cxy = jax.random.uniform(k1, (B, M, 2), minval=8.0, maxval=56.0)
    wh = jax.random.uniform(k2, (B, M, 2), minval=6.0, maxval=20.0)
    labels = jax.random.randint(k3, (B, M, 1), 0, C).astype(jnp.float32)
    pad = (jnp.arange(M) >= M - 3)[None, :, None]
    labels = jnp.where(pad, -1.0, labels)
    annotations = jnp.concatenate([cxy - wh / 2, cxy + wh / 2, labels], axis=-1)

    # anchors (1, A, 4): first B*M anchors are jittered GT boxes (guarantees positives)
    rand_cxy = jax.random.uniform(k4, (A, 2), minval=4.0, maxval=60.0)
    rand_wh = jnp.full((A, 2), 10.0, dtype=jnp.float32)
    anchors = jnp.concatenate([rand_cxy - rand_wh / 2, rand_cxy + rand_wh / 2], axis=-1)
    anchors = anchors.at[: B * M].set(annotations[:, :, :4].reshape(B * M, 4) + 0.5)
    anchors = anchors[None]  # (1, A, 4)

    classifications = jax.random.normal(k5, (B, A, C), dtype=jnp.float32)
    regressions = 0.1 * jax.random.normal(k6, (B, A, 4), dtype=jnp.float32)

    # anchor_tile=128 -> 4 anchor tiles: exercises the accumulator/finalize path.
    clf_l, reg_l, n = loss_head_forward(classifications, regressions, anchors,
                                        annotations, anchor_tile=128)
    jax.block_until_ready((clf_l, reg_l, n))
    assert clf_l.shape == (B,) and reg_l.shape == (B,) and n.shape == (B, 1)
    assert bool(jnp.all(jnp.isfinite(clf_l))) and bool(jnp.all(jnp.isfinite(reg_l)))
    print("KERNEL_OK")
</pallas_src>

<mosaic_0001>
module attributes {stable_mosaic.version = 11 : i64} {
  func.func @_loss_head_kernel(%arg0: i32, %arg1: i32, %arg2: memref<1x8x128xf32, #tpu.memory_space<vmem>>, %arg3: memref<1x4x128xf32, #tpu.memory_space<vmem>>, %arg4: memref<16x128xf32, #tpu.memory_space<vmem>>, %arg5: memref<1x8x8xf32, #tpu.memory_space<vmem>>, %arg6: memref<1x8x8xf32, #tpu.memory_space<vmem>>, %arg7: memref<1x8x128xf32, #tpu.memory_space<vmem>>, %arg8: memref<8x128xf32, #tpu.memory_space<vmem>>) attributes {dimension_semantics = [#tpu.dimension_semantics<parallel>, #tpu.dimension_semantics<arbitrary>], iteration_bounds = array<i64: 2, 4>, scalar_prefetch = 0 : i64, scratch_operands = 1 : i64, tpu.core_type = #tpu.core_type<tc>, window_params = [{transform_indices = @transform_0, window_bounds = array<i64: 1, 8, 128>}, {transform_indices = @transform_1, window_bounds = array<i64: 1, 4, 128>}, {transform_indices = @transform_2, window_bounds = array<i64: 16, 128>}, {transform_indices = @transform_3, window_bounds = array<i64: 1, 8, 8>}, {transform_indices = @transform_4, window_bounds = array<i64: 1, 8, 8>}, {transform_indices = @transform_5, window_bounds = array<i64: 1, 8, 128>}]} {
    %c0 = arith.constant 0 : index
    %c0_0 = arith.constant 0 : index
    %c0_1 = arith.constant 0 : index
    %0 = vector.load %arg2[%c0, %c0_0, %c0_1] : memref<1x8x128xf32, #tpu.memory_space<vmem>>, vector<1x8x128xf32>
    %1 = vector.shape_cast %0 : vector<1x8x128xf32> to vector<8x128xf32>
    %c0_2 = arith.constant 0 : index
    %c0_3 = arith.constant 0 : index
    %c0_4 = arith.constant 0 : index
    %2 = vector.load %arg3[%c0_2, %c0_3, %c0_4] : memref<1x4x128xf32, #tpu.memory_space<vmem>>, vector<1x4x128xf32>
    %3 = vector.shape_cast %2 : vector<1x4x128xf32> to vector<4x128xf32>
    %c0_5 = arith.constant 0 : index
    %c0_6 = arith.constant 0 : index
    %4 = vector.load %arg4[%c0_5, %c0_6] : memref<16x128xf32, #tpu.memory_space<vmem>>, vector<16x128xf32>
    %c0_7 = arith.constant 0 : index
    %c0_8 = arith.constant 0 : index
    %c0_9 = arith.constant 0 : index
    %5 = vector.load %arg5[%c0_7, %c0_8, %c0_9] : memref<1x8x8xf32, #tpu.memory_space<vmem>>, vector<1x8x8xf32>
    %6 = vector.shape_cast %5 : vector<1x8x8xf32> to vector<8x8xf32>
    %c0_10 = arith.constant 0 : index
    %c0_11 = arith.constant 0 : index
    %c0_12 = arith.constant 0 : index
    %7 = vector.load %arg6[%c0_10, %c0_11, %c0_12] : memref<1x8x8xf32, #tpu.memory_space<vmem>>, vector<1x8x8xf32>
    %8 = vector.shape_cast %7 : vector<1x8x8xf32> to vector<8x8xf32>
    %c0_i32 = arith.constant 0 : i32
    %9 = arith.cmpi eq, %arg1, %c0_i32 : i32
    %10 = arith.extui %9 : i1 to i32
    %c0_i32_13 = arith.constant 0 : i32
    %11 = arith.cmpi ne, %10, %c0_i32_13 : i32
    scf.if %11 {
      %cst_63 = arith.constant 0.000000e+00 : f32
      %260 = vector.broadcast %cst_63 : f32 to vector<8x128xf32>
      %c0_64 = arith.constant 0 : index
      %c0_65 = arith.constant 0 : index
      %261 = vector.load %arg8[%c0_64, %c0_65] : memref<8x128xf32, #tpu.memory_space<vmem>>, vector<8x128xf32>
      tpu.vector_store %arg8[%c0_64, %c0_65], %260 {strides = array<i32>} : memref<8x128xf32, #tpu.memory_space<vmem>>, vector<8x128xf32>,
    } else {
    }
    %12 = vector.extract_strided_slice %4 {offsets = [0, 0], sizes = [1, 128], strides = [1, 1]} : vector<16x128xf32> to vector<1x128xf32>
    %13 = vector.extract_strided_slice %4 {offsets = [1, 0], sizes = [1, 128], strides = [1, 1]} : vector<16x128xf32> to vector<1x128xf32>
    %14 = vector.extract_strided_slice %4 {offsets = [2, 0], sizes = [1, 128], strides = [1, 1]} : vector<16x128xf32> to vector<1x128xf32>
    %15 = vector.extract_strided_slice %4 {offsets = [3, 0], sizes = [1, 128], strides = [1, 1]} : vector<16x128xf32> to vector<1x128xf32>
    %16 = vector.extract_strided_slice %4 {offsets = [4, 0], sizes = [1, 128], strides = [1, 1]} : vector<16x128xf32> to vector<1x128xf32>
    %17 = vector.extract_strided_slice %4 {offsets = [5, 0], sizes = [1, 128], strides = [1, 1]} : vector<16x128xf32> to vector<1x128xf32>
    %18 = vector.extract_strided_slice %4 {offsets = [6, 0], sizes = [1, 128], strides = [1, 1]} : vector<16x128xf32> to vector<1x128xf32>
    %19 = vector.extract_strided_slice %4 {offsets = [7, 0], sizes = [1, 128], strides = [1, 1]} : vector<16x128xf32> to vector<1x128xf32>
    %20 = vector.extract_strided_slice %4 {offsets = [8, 0], sizes = [1, 128], strides = [1, 1]} : vector<16x128xf32> to vector<1x128xf32>
    %21 = vector.extract_strided_slice %4 {offsets = [9, 0], sizes = [1, 128], strides = [1, 1]} : vector<16x128xf32> to vector<1x128xf32>
    %22 = vector.extract_strided_slice %4 {offsets = [10, 0], sizes = [1, 128], strides = [1, 1]} : vector<16x128xf32> to vector<1x128xf32>
    %23 = vector.extract_strided_slice %4 {offsets = [11, 0], sizes = [1, 128], strides = [1, 1]} : vector<16x128xf32> to vector<1x128xf32>
    %24 = vector.extract_strided_slice %6 {offsets = [0, 0], sizes = [8, 1], strides = [1, 1]} : vector<8x8xf32> to vector<8x1xf32>
    %25 = vector.extract_strided_slice %6 {offsets = [0, 1], sizes = [8, 1], strides = [1, 1]} : vector<8x8xf32> to vector<8x1xf32>
    %26 = vector.extract_strided_slice %6 {offsets = [0, 2], sizes = [8, 1], strides = [1, 1]} : vector<8x8xf32> to vector<8x1xf32>
    %27 = vector.extract_strided_slice %6 {offsets = [0, 3], sizes = [8, 1], strides = [1, 1]} : vector<8x8xf32> to vector<8x1xf32>
    %28 = vector.extract_strided_slice %6 {offsets = [0, 4], sizes = [8, 1], strides = [1, 1]} : vector<8x8xf32> to vector<8x1xf32>
    %cst = arith.constant -1.000000e+00 : f32
    %29 = vector.broadcast %cst : f32 to vector<8x1xf32>
    %30 = arith.cmpf one, %28, %29 : vector<8x1xf32>
    %31 = vector.broadcast %12 : vector<1x128xf32> to vector<8x128xf32>
    %32 = vector.broadcast %24 : vector<8x1xf32> to vector<8x128xf32>
    %33 = arith.maximumf %31, %32 : vector<8x128xf32>
    %34 = vector.broadcast %13 : vector<1x128xf32> to vector<8x128xf32>
    %35 = vector.broadcast %25 : vector<8x1xf32> to vector<8x128xf32>
    %36 = arith.maximumf %34, %35 : vector<8x128xf32>
    %37 = vector.broadcast %14 : vector<1x128xf32> to vector<8x128xf32>
    %38 = vector.broadcast %26 : vector<8x1xf32> to vector<8x128xf32>
    %39 = arith.minimumf %37, %38 : vector<8x128xf32>
    %40 = vector.broadcast %15 : vector<1x128xf32> to vector<8x128xf32>
    %41 = vector.broadcast %27 : vector<8x1xf32> to vector<8x128xf32>
    %42 = arith.minimumf %40, %41 : vector<8x128xf32>
    %43 = arith.subf %39, %33 : vector<8x128xf32>
    %cst_14 = arith.constant 0.000000e+00 : f32
    %44 = vector.broadcast %cst_14 : f32 to vector<8x128xf32>
    %45 = arith.maximumf %43, %44 : vector<8x128xf32>
    %46 = arith.subf %42, %36 : vector<8x128xf32>
    %cst_15 = arith.constant 0.000000e+00 : f32
    %47 = vector.broadcast %cst_15 : f32 to vector<8x128xf32>
    %48 = arith.maximumf %46, %47 : vector<8x128xf32>
    %49 = arith.mulf %45, %48 : vector<8x128xf32>
    %50 = arith.subf %26, %24 : vector<8x1xf32>
    %51 = arith.subf %27, %25 : vector<8x1xf32>
    %52 = arith.mulf %50, %51 : vector<8x1xf32>
    %53 = vector.broadcast %16 : vector<1x128xf32> to vector<8x128xf32>
    %54 = vector.broadcast %52 : vector<8x1xf32> to vector<8x128xf32>
    %55 = arith.addf %53, %54 : vector<8x128xf32>
    %56 = arith.subf %55, %49 : vector<8x128xf32>
    %cst_16 = arith.constant 9.99999993E-9 : f32
    %57 = vector.broadcast %cst_16 : f32 to vector<8x128xf32>
    %58 = arith.addf %56, %57 : vector<8x128xf32>
    %59 = arith.divf %49, %58 : vector<8x128xf32>
    %cst_17 = arith.constant -1.000000e+00 : f32
    %60 = vector.shape_cast %30 : vector<8x1xi1> to vector<8x1xi1>
    %61 = vector.broadcast %60 : vector<8x1xi1> to vector<8x128xi1>
    %62 = vector.broadcast %cst_17 : f32 to vector<8x128xf32>
    %63 = arith.select %61, %59, %62 : vector<8x128xi1>, vector<8x128xf32>
    %cst_18 = arith.constant dense<0xFF800000> : vector<128xf32>
    %64 = vector.multi_reduction <maximumf>, %63, %cst_18 [0] : vector<8x128xf32> to vector<128xf32>
    %65 = vector.shape_cast %64 : vector<128xf32> to vector<1x128xf32>
    %66 = tpu.iota {dimensions = array<i32: 0>} : vector<8x128xi32>
    %67 = vector.broadcast %65 : vector<1x128xf32> to vector<8x128xf32>
    %68 = arith.cmpf oeq, %63, %67 : vector<8x128xf32>
    %c8_i32 = arith.constant 8 : i32
    %69 = vector.broadcast %c8_i32 : i32 to vector<8x128xi32>
    %70 = arith.select %68, %66, %69 : vector<8x128xi1>, vector<8x128xi32>
    %cst_19 = arith.constant dense<2147483647> : vector<128xi32>
    %71 = vector.multi_reduction <minsi>, %70, %cst_19 [0] : vector<8x128xi32> to vector<128xi32>
    %72 = vector.shape_cast %71 : vector<128xi32> to vector<1x128xi32>
    %73 = vector.broadcast %72 : vector<1x128xi32> to vector<8x128xi32>
    %74 = arith.cmpi eq, %66, %73 : vector<8x128xi32>
    %75 = arith.extui %74 : vector<8x128xi1> to vector<8x128xi32>
    %76 = arith.sitofp %75 : vector<8x128xi32> to vector<8x128xf32>
    %cst_20 = arith.constant 5.000000e-01 : f32
    %77 = vector.broadcast %cst_20 : f32 to vector<1x128xf32>
    %78 = arith.cmpf oge, %65, %77 : vector<1x128xf32>
    %cst_21 = arith.constant 4.000000e-01 : f32
    %79 = vector.broadcast %cst_21 : f32 to vector<1x128xf32>
    %80 = arith.cmpf oge, %65, %79 : vector<1x128xf32>
    %cst_22 = arith.constant dense<true> : vector<1x128xi1>
    %81 = arith.xori %78, %cst_22 : vector<1x128xi1>
    %82 = arith.andi %80, %81 : vector<1x128xi1>
    %cst_23 = arith.constant dense<0.000000e+00> : vector<8x128xf32>
    %83 = tpu.matmul %8, %76, %cst_23 {dimension_numbers = #tpu.dot_dimension_numbers<[1], [0], [0], [1], [0, 0, 1, 1], [], []>} : vector<8x8xf32>, vector<8x128xf32>, vector<8x128xf32> -> vector<8x128xf32>
    %84 = vector.extract_strided_slice %83 {offsets = [0, 0], sizes = [1, 128], strides = [1, 1]} : vector<8x128xf32> to vector<1x128xf32>
    %85 = vector.extract_strided_slice %83 {offsets = [1, 0], sizes = [1, 128], strides = [1, 1]} : vector<8x128xf32> to vector<1x128xf32>
    %86 = vector.extract_strided_slice %83 {offsets = [2, 0], sizes = [1, 128], strides = [1, 1]} : vector<8x128xf32> to vector<1x128xf32>
    %87 = vector.extract_strided_slice %83 {offsets = [3, 0], sizes = [1, 128], strides = [1, 1]} : vector<8x128xf32> to vector<1x128xf32>
    %88 = vector.extract_strided_slice %83 {offsets = [4, 0], sizes = [1, 128], strides = [1, 1]} : vector<8x128xf32> to vector<1x128xf32>
    %89 = arith.subf %87, %85 : vector<1x128xf32>
    %90 = arith.subf %88, %86 : vector<1x128xf32>
    %91 = arith.mulf %89, %90 : vector<1x128xf32>
    %cst_24 = arith.constant 9.99999993E-9 : f32
    %92 = vector.broadcast %cst_24 : f32 to vector<1x128xf32>
    %93 = arith.maximumf %91, %92 : vector<1x128xf32>
    %94 = math.rsqrt %93 : vector<1x128xf32>
    %cst_25 = arith.constant 4.000000e+00 : f32
    %95 = vector.broadcast %cst_25 : f32 to vector<1x128xf32>
    %96 = arith.mulf %95, %94 : vector<1x128xf32>
    %97 = arith.extui %78 : vector<1x128xi1> to vector<1x128xi32>
    %98 = arith.sitofp %97 : vector<1x128xi32> to vector<1x128xf32>
    %99 = arith.mulf %98, %23 : vector<1x128xf32>
    %100 = arith.extui %82 : vector<1x128xi1> to vector<1x128xi32>
    %101 = arith.sitofp %100 : vector<1x128xi32> to vector<1x128xf32>
    %cst_26 = arith.constant 1.000000e+00 : f32
    %102 = vector.broadcast %cst_26 : f32 to vector<1x128xf32>
    %103 = arith.subf %102, %101 : vector<1x128xf32>
    %104 = arith.mulf %103, %23 : vector<1x128xf32>
    %cst_27 = arith.constant 0.000000e+00 : f32
    %105 = vector.broadcast %cst_27 : f32 to vector<1x128xf32>
    %106 = arith.select %78, %84, %105 : vector<1x128xi1>, vector<1x128xf32>
    %107 = arith.fptosi %106 : vector<1x128xf32> to vector<1x128xi32>
    %108 = arith.mulf %99, %96 : vector<1x128xf32>
    %109 = tpu.iota {dimensions = array<i32: 0>} : vector<8x128xi32>
    %110 = vector.broadcast %107 : vector<1x128xi32> to vector<8x128xi32>
    %111 = arith.cmpi eq, %109, %110 : vector<8x128xi32>
    %112 = arith.extui %111 : vector<8x128xi1> to vector<8x128xi32>
    %113 = arith.sitofp %112 : vector<8x128xi32> to vector<8x128xf32>
    %114 = vector.broadcast %108 : vector<1x128xf32> to vector<8x128xf32>
    %115 = arith.mulf %114, %113 : vector<8x128xf32>
    %116 = arith.subf %1, %115 : vector<8x128xf32>
    %cst_28 = arith.constant dense<0xFF800000> : vector<128xf32>
    %117 = vector.multi_reduction <maximumf>, %116, %cst_28 [0] : vector<8x128xf32> to vector<128xf32>
    %118 = vector.shape_cast %117 : vector<128xf32> to vector<1x128xf32>
    %119 = vector.broadcast %118 : vector<1x128xf32> to vector<8x128xf32>
    %120 = arith.subf %116, %119 : vector<8x128xf32>
    %121 = math.exp %120 : vector<8x128xf32>
    %cst_29 = arith.constant dense<0.000000e+00> : vector<128xf32>
    %122 = vector.multi_reduction <add>, %121, %cst_29 [0] : vector<8x128xf32> to vector<128xf32>
    %123 = vector.shape_cast %122 : vector<128xf32> to vector<1x128xf32>
    %124 = math.log %123 : vector<1x128xf32>
    %125 = arith.mulf %120, %113 : vector<8x128xf32>
    %cst_30 = arith.constant dense<0.000000e+00> : vector<128xf32>
    %126 = vector.multi_reduction <add>, %125, %cst_30 [0] : vector<8x128xf32> to vector<128xf32>
    %127 = vector.shape_cast %126 : vector<128xf32> to vector<1x128xf32>
    %128 = arith.subf %124, %127 : vector<1x128xf32>
    %129 = arith.mulf %128, %104 : vector<1x128xf32>
    %130 = vector.shape_cast %129 : vector<1x128xf32> to vector<1x1x128xf32>
    %cst_31 = arith.constant dense<0.000000e+00> : vector<1xf32>
    %131 = vector.multi_reduction <add>, %130, %cst_31 [1, 2] : vector<1x1x128xf32> to vector<1xf32>
    %132 = vector.shape_cast %131 : vector<1xf32> to vector<1x1x1xf32>
    %133 = vector.extract %132[0, 0, 0] : f32 from vector<1x1x1xf32>
    %134 = vector.shape_cast %104 : vector<1x128xf32> to vector<1x1x128xf32>
    %cst_32 = arith.constant dense<0.000000e+00> : vector<1xf32>
    %135 = vector.multi_reduction <add>, %134, %cst_32 [1, 2] : vector<1x1x128xf32> to vector<1xf32>
    %136 = vector.shape_cast %135 : vector<1xf32> to vector<1x1x1xf32>
    %137 = vector.extract %136[0, 0, 0] : f32 from vector<1x1x1xf32>
    %138 = arith.subf %87, %85 : vector<1x128xf32>
    %cst_33 = arith.constant 9.99999993E-9 : f32
    %139 = vector.broadcast %cst_33 : f32 to vector<1x128xf32>
    %140 = arith.maximumf %138, %139 : vector<1x128xf32>
    %141 = arith.subf %88, %86 : vector<1x128xf32>
    %cst_34 = arith.constant 9.99999993E-9 : f32
    %142 = vector.broadcast %cst_34 : f32 to vector<1x128xf32>
    %143 = arith.maximumf %141, %142 : vector<1x128xf32>
    %144 = arith.addf %85, %87 : vector<1x128xf32>
    %cst_35 = arith.constant 5.000000e-01 : f32
    %145 = vector.broadcast %cst_35 : f32 to vector<1x128xf32>
    %146 = arith.mulf %145, %144 : vector<1x128xf32>
    %147 = arith.addf %86, %88 : vector<1x128xf32>
    %cst_36 = arith.constant 5.000000e-01 : f32
    %148 = vector.broadcast %cst_36 : f32 to vector<1x128xf32>
    %149 = arith.mulf %148, %147 : vector<1x128xf32>
    %150 = arith.subf %146, %17 : vector<1x128xf32>
    %151 = arith.mulf %150, %19 : vector<1x128xf32>
    %152 = arith.subf %149, %18 : vector<1x128xf32>
    %153 = arith.mulf %152, %20 : vector<1x128xf32>
    %154 = math.log %140 : vector<1x128xf32>
    %155 = arith.subf %154, %21 : vector<1x128xf32>
    %156 = math.log %143 : vector<1x128xf32>
    %157 = arith.subf %156, %22 : vector<1x128xf32>
    %158 = vector.shape_cast %99 : vector<1x128xf32> to vector<1x1x128xf32>
    %cst_37 = arith.constant dense<0.000000e+00> : vector<1xf32>
    %159 = vector.multi_reduction <add>, %158, %cst_37 [1, 2] : vector<1x1x128xf32> to vector<1xf32>
    %160 = vector.shape_cast %159 : vector<1xf32> to vector<1x1x1xf32>
    %161 = vector.extract %160[0, 0, 0] : f32 from vector<1x1x1xf32>
    %162 = vector.extract_strided_slice %3 {offsets = [0, 0], sizes = [1, 128], strides = [1, 1]} : vector<4x128xf32> to vector<1x128xf32>
    %163 = arith.subf %162, %151 : vector<1x128xf32>
    %164 = math.absf %163 : vector<1x128xf32>
    %cst_38 = arith.constant 1.000000e+00 : f32
    %165 = vector.broadcast %cst_38 : f32 to vector<1x128xf32>
    %166 = arith.cmpf olt, %164, %165 : vector<1x128xf32>
    %cst_39 = arith.constant 5.000000e-01 : f32
    %167 = vector.broadcast %cst_39 : f32 to vector<1x128xf32>
    %168 = arith.mulf %167, %163 : vector<1x128xf32>
    %169 = arith.mulf %168, %163 : vector<1x128xf32>
    %cst_40 = arith.constant 5.000000e-01 : f32
    %170 = vector.broadcast %cst_40 : f32 to vector<1x128xf32>
    %171 = arith.subf %164, %170 : vector<1x128xf32>
    %172 = arith.select %166, %169, %171 : vector<1x128xi1>, vector<1x128xf32>
    %173 = arith.mulf %99, %172 : vector<1x128xf32>
    %174 = vector.shape_cast %173 : vector<1x128xf32> to vector<1x1x128xf32>
    %cst_41 = arith.constant dense<0.000000e+00> : vector<1xf32>
    %175 = vector.multi_reduction <add>, %174, %cst_41 [1, 2] : vector<1x1x128xf32> to vector<1xf32>
    %176 = vector.shape_cast %175 : vector<1xf32> to vector<1x1x1xf32>
    %177 = vector.extract %176[0, 0, 0] : f32 from vector<1x1x1xf32>
    %178 = vector.extract_strided_slice %3 {offsets = [1, 0], sizes = [1, 128], strides = [1, 1]} : vector<4x128xf32> to vector<1x128xf32>
    %179 = arith.subf %178, %153 : vector<1x128xf32>
    %180 = math.absf %179 : vector<1x128xf32>
    %cst_42 = arith.constant 1.000000e+00 : f32
    %181 = vector.broadcast %cst_42 : f32 to vector<1x128xf32>
    %182 = arith.cmpf olt, %180, %181 : vector<1x128xf32>
    %cst_43 = arith.constant 5.000000e-01 : f32
    %183 = vector.broadcast %cst_43 : f32 to vector<1x128xf32>
    %184 = arith.mulf %183, %179 : vector<1x128xf32>
    %185 = arith.mulf %184, %179 : vector<1x128xf32>
    %cst_44 = arith.constant 5.000000e-01 : f32
    %186 = vector.broadcast %cst_44 : f32 to vector<1x128xf32>
    %187 = arith.subf %180, %186 : vector<1x128xf32>
    %188 = arith.select %182, %185, %187 : vector<1x128xi1>, vector<1x128xf32>
    %189 = arith.mulf %99, %188 : vector<1x128xf32>
    %190 = vector.shape_cast %189 : vector<1x128xf32> to vector<1x1x128xf32>
    %cst_45 = arith.constant dense<0.000000e+00> : vector<1xf32>
    %191 = vector.multi_reduction <add>, %190, %cst_45 [1, 2] : vector<1x1x128xf32> to vector<1xf32>
    %192 = vector.shape_cast %191 : vector<1xf32> to vector<1x1x1xf32>
    %193 = vector.extract %192[0, 0, 0] : f32 from vector<1x1x1xf32>
    %194 = arith.addf %177, %193 : f32
    %195 = vector.extract_strided_slice %3 {offsets = [2, 0], sizes = [1, 128], strides = [1, 1]} : vector<4x128xf32> to vector<1x128xf32>
    %196 = arith.subf %195, %155 : vector<1x128xf32>
    %197 = math.absf %196 : vector<1x128xf32>
    %cst_46 = arith.constant 1.000000e+00 : f32
    %198 = vector.broadcast %cst_46 : f32 to vector<1x128xf32>
    %199 = arith.cmpf olt, %197, %198 : vector<1x128xf32>
    %cst_47 = arith.constant 5.000000e-01 : f32
    %200 = vector.broadcast %cst_47 : f32 to vector<1x128xf32>
    %201 = arith.mulf %200, %196 : vector<1x128xf32>
    %202 = arith.mulf %201, %196 : vector<1x128xf32>
    %cst_48 = arith.constant 5.000000e-01 : f32
    %203 = vector.broadcast %cst_48 : f32 to vector<1x128xf32>
    %204 = arith.subf %197, %203 : vector<1x128xf32>
    %205 = arith.select %199, %202, %204 : vector<1x128xi1>, vector<1x128xf32>
    %206 = arith.mulf %99, %205 : vector<1x128xf32>
    %207 = vector.shape_cast %206 : vector<1x128xf32> to vector<1x1x128xf32>
    %cst_49 = arith.constant dense<0.000000e+00> : vector<1xf32>
    %208 = vector.multi_reduction <add>, %207, %cst_49 [1, 2] : vector<1x1x128xf32> to vector<1xf32>
    %209 = vector.shape_cast %208 : vector<1xf32> to vector<1x1x1xf32>
    %210 = vector.extract %209[0, 0, 0] : f32 from vector<1x1x1xf32>
    %211 = arith.addf %194, %210 : f32
    %212 = vector.extract_strided_slice %3 {offsets = [3, 0], sizes = [1, 128], strides = [1, 1]} : vector<4x128xf32> to vector<1x128xf32>
    %213 = arith.subf %212, %157 : vector<1x128xf32>
    %214 = math.absf %213 : vector<1x128xf32>
    %cst_50 = arith.constant 1.000000e+00 : f32
    %215 = vector.broadcast %cst_50 : f32 to vector<1x128xf32>
    %216 = arith.cmpf olt, %214, %215 : vector<1x128xf32>
    %cst_51 = arith.constant 5.000000e-01 : f32
    %217 = vector.broadcast %cst_51 : f32 to vector<1x128xf32>
    %218 = arith.mulf %217, %213 : vector<1x128xf32>
    %219 = arith.mulf %218, %213 : vector<1x128xf32>
    %cst_52 = arith.constant 5.000000e-01 : f32
    %220 = vector.broadcast %cst_52 : f32 to vector<1x128xf32>
    %221 = arith.subf %214, %220 : vector<1x128xf32>
    %222 = arith.select %216, %219, %221 : vector<1x128xi1>, vector<1x128xf32>
    %223 = arith.mulf %99, %222 : vector<1x128xf32>
    %224 = vector.shape_cast %223 : vector<1x128xf32> to vector<1x1x128xf32>
    %cst_53 = arith.constant dense<0.000000e+00> : vector<1xf32>
    %225 = vector.multi_reduction <add>, %224, %cst_53 [1, 2] : vector<1x1x128xf32> to vector<1xf32>
    %226 = vector.shape_cast %225 : vector<1xf32> to vector<1x1x1xf32>
    %227 = vector.extract %226[0, 0, 0] : f32 from vector<1x1x1xf32>
    %228 = arith.addf %211, %227 : f32
    %229 = tpu.iota {dimensions = array<i32: 1>} : vector<8x128xi32>
    %230 = tpu.iota {dimensions = array<i32: 0>} : vector<8x128xi32>
    %c0_i32_54 = arith.constant 0 : i32
    %231 = vector.broadcast %c0_i32_54 : i32 to vector<8x128xi32>
    %232 = arith.cmpi eq, %230, %231 : vector<8x128xi32>
    %c0_55 = arith.constant 0 : index
    %c0_56 = arith.constant 0 : index
    %233 = vector.load %arg8[%c0_55, %c0_56] : memref<8x128xf32, #tpu.memory_space<vmem>>, vector<8x128xf32>
    %c0_i32_57 = arith.constant 0 : i32
    %234 = vector.broadcast %c0_i32_57 : i32 to vector<8x128xi32>
    %235 = arith.cmpi eq, %229, %234 : vector<8x128xi32>
    %236 = arith.andi %232, %235 : vector<8x128xi1>
    %c1_i32 = arith.constant 1 : i32
    %237 = vector.broadcast %c1_i32 : i32 to vector<8x128xi32>
    %238 = arith.cmpi eq, %229, %237 : vector<8x128xi32>
    %239 = arith.andi %232, %238 : vector<8x128xi1>
    %c2_i32 = arith.constant 2 : i32
    %240 = vector.broadcast %c2_i32 : i32 to vector<8x128xi32>
    %241 = arith.cmpi eq, %229, %240 : vector<8x128xi32>
    %242 = arith.andi %232, %241 : vector<8x128xi1>
    %c3_i32 = arith.constant 3 : i32
    %243 = vector.broadcast %c3_i32 : i32 to vector<8x128xi32>
    %244 = arith.cmpi eq, %229, %243 : vector<8x128xi32>
    %245 = arith.andi %232, %244 : vector<8x128xi1>
    %cst_58 = arith.constant 0.000000e+00 : f32
    %246 = vector.broadcast %161 : f32 to vector<8x128xf32>
    %247 = vector.broadcast %cst_58 : f32 to vector<8x128xf32>
    %248 = arith.select %245, %246, %247 : vector<8x128xi1>, vector<8x128xf32>
    %249 = vector.broadcast %228 : f32 to vector<8x128xf32>
    %250 = arith.select %242, %249, %248 : vector<8x128xi1>, vector<8x128xf32>
    %251 = vector.broadcast %137 : f32 to vector<8x128xf32>
    %252 = arith.select %239, %251, %250 : vector<8x128xi1>, vector<8x128xf32>
    %253 = vector.broadcast %133 : f32 to vector<8x128xf32>
    %254 = arith.select %236, %253, %252 : vector<8x128xi1>, vector<8x128xf32>
    %255 = arith.addf %233, %254 : vector<8x128xf32>
    %c0_59 = arith.constant 0 : index
    %c0_60 = arith.constant 0 : index
    %256 = vector.load %arg8[%c0_59, %c0_60] : memref<8x128xf32, #tpu.memory_space<vmem>>, vector<8x128xf32>
    tpu.vector_store %arg8[%c0_59, %c0_60], %255 {strides = array<i32>} : memref<8x128xf32, #tpu.memory_space<vmem>>, vector<8x128xf32>,
    %c3_i32_61 = arith.constant 3 : i32
    %257 = arith.cmpi eq, %arg1, %c3_i32_61 : i32
    %258 = arith.extui %257 : i1 to i32
    %c0_i32_62 = arith.constant 0 : i32
    %259 = arith.cmpi ne, %258, %c0_i32_62 : i32
    scf.if %259 {
      %c0_63 = arith.constant 0 : index
      %c0_64 = arith.constant 0 : index
      %260 = vector.load %arg8[%c0_63, %c0_64] : memref<8x128xf32, #tpu.memory_space<vmem>>, vector<8x128xf32>
      %c0_i32_65 = arith.constant 0 : i32
      %261 = vector.broadcast %c0_i32_65 : i32 to vector<8x128xi32>
      %262 = arith.cmpi eq, %229, %261 : vector<8x128xi32>
      %263 = arith.andi %232, %262 : vector<8x128xi1>
      %cst_66 = arith.constant 0.000000e+00 : f32
      %264 = vector.broadcast %cst_66 : f32 to vector<8x128xf32>
      %265 = arith.select %263, %260, %264 : vector<8x128xi1>, vector<8x128xf32>
      %266 = vector.shape_cast %265 : vector<8x128xf32> to vector<1x8x128xf32>
      %cst_67 = arith.constant dense<0.000000e+00> : vector<1xf32>
      %267 = vector.multi_reduction <add>, %266, %cst_67 [1, 2] : vector<1x8x128xf32> to vector<1xf32>
      %268 = vector.shape_cast %267 : vector<1xf32> to vector<1x1x1xf32>
      %269 = vector.extract %268[0, 0, 0] : f32 from vector<1x1x1xf32>
      %c1_i32_68 = arith.constant 1 : i32
      %270 = vector.broadcast %c1_i32_68 : i32 to vector<8x128xi32>
      %271 = arith.cmpi eq, %229, %270 : vector<8x128xi32>
      %272 = arith.andi %232, %271 : vector<8x128xi1>
      %cst_69 = arith.constant 0.000000e+00 : f32
      %273 = vector.broadcast %cst_69 : f32 to vector<8x128xf32>
      %274 = arith.select %272, %260, %273 : vector<8x128xi1>, vector<8x128xf32>
      %275 = vector.shape_cast %274 : vector<8x128xf32> to vector<1x8x128xf32>
      %cst_70 = arith.constant dense<0.000000e+00> : vector<1xf32>
      %276 = vector.multi_reduction <add>, %275, %cst_70 [1, 2] : vector<1x8x128xf32> to vector<1xf32>
      %277 = vector.shape_cast %276 : vector<1xf32> to vector<1x1x1xf32>
      %278 = vector.extract %277[0, 0, 0] : f32 from vector<1x1x1xf32>
      %c2_i32_71 = arith.constant 2 : i32
      %279 = vector.broadcast %c2_i32_71 : i32 to vector<8x128xi32>
      %280 = arith.cmpi eq, %229, %279 : vector<8x128xi32>
      %281 = arith.andi %232, %280 : vector<8x128xi1>
      %cst_72 = arith.constant 0.000000e+00 : f32
      %282 = vector.broadcast %cst_72 : f32 to vector<8x128xf32>
      %283 = arith.select %281, %260, %282 : vector<8x128xi1>, vector<8x128xf32>
      %284 = vector.shape_cast %283 : vector<8x128xf32> to vector<1x8x128xf32>
      %cst_73 = arith.constant dense<0.000000e+00> : vector<1xf32>
      %285 = vector.multi_reduction <add>, %284, %cst_73 [1, 2] : vector<1x8x128xf32> to vector<1xf32>
      %286 = vector.shape_cast %285 : vector<1xf32> to vector<1x1x1xf32>
      %287 = vector.extract %286[0, 0, 0] : f32 from vector<1x1x1xf32>
      %c3_i32_74 = arith.constant 3 : i32
      %288 = vector.broadcast %c3_i32_74 : i32 to vector<8x128xi32>
      %289 = arith.cmpi eq, %229, %288 : vector<8x128xi32>
      %290 = arith.andi %232, %289 : vector<8x128xi1>
      %cst_75 = arith.constant 0.000000e+00 : f32
      %291 = vector.broadcast %cst_75 : f32 to vector<8x128xf32>
      %292 = arith.select %290, %260, %291 : vector<8x128xi1>, vector<8x128xf32>
      %293 = vector.shape_cast %292 : vector<8x128xf32> to vector<1x8x128xf32>
      %cst_76 = arith.constant dense<0.000000e+00> : vector<1xf32>
      %294 = vector.multi_reduction <add>, %293, %cst_76 [1, 2] : vector<1x8x128xf32> to vector<1xf32>
      %295 = vector.shape_cast %294 : vector<1xf32> to vector<1x1x1xf32>
      %296 = vector.extract %295[0, 0, 0] : f32 from vector<1x1x1xf32>
      %cst_77 = arith.constant 1.000000e+00 : f32
      %297 = arith.maximumf %278, %cst_77 : f32
      %298 = arith.divf %269, %297 : f32
      %cst_78 = arith.constant 4.000000e+00 : f32
      %299 = arith.mulf %cst_78, %296 : f32
      %cst_79 = arith.constant 1.000000e+00 : f32
      %300 = arith.maximumf %299, %cst_79 : f32
      %301 = arith.divf %287, %300 : f32
      %c0_i32_80 = arith.constant 0 : i32
      %302 = vector.broadcast %c0_i32_80 : i32 to vector<8x128xi32>
      %303 = arith.cmpi eq, %229, %302 : vector<8x128xi32>
      %304 = arith.andi %232, %303 : vector<8x128xi1>
      %c1_i32_81 = arith.constant 1 : i32
      %305 = vector.broadcast %c1_i32_81 : i32 to vector<8x128xi32>
      %306 = arith.cmpi eq, %229, %305 : vector<8x128xi32>
      %307 = arith.andi %232, %306 : vector<8x128xi1>
      %c2_i32_82 = arith.constant 2 : i32
      %308 = vector.broadcast %c2_i32_82 : i32 to vector<8x128xi32>
      %309 = arith.cmpi eq, %229, %308 : vector<8x128xi32>
      %310 = arith.andi %232, %309 : vector<8x128xi1>
      %cst_83 = arith.constant 0.000000e+00 : f32
      %311 = vector.broadcast %296 : f32 to vector<8x128xf32>
      %312 = vector.broadcast %cst_83 : f32 to vector<8x128xf32>
      %313 = arith.select %310, %311, %312 : vector<8x128xi1>, vector<8x128xf32>
      %314 = vector.broadcast %301 : f32 to vector<8x128xf32>
      %315 = arith.select %307, %314, %313 : vector<8x128xi1>, vector<8x128xf32>
      %316 = vector.broadcast %298 : f32 to vector<8x128xf32>
      %317 = arith.select %304, %316, %315 : vector<8x128xi1>, vector<8x128xf32>
      %c0_84 = arith.constant 0 : index
      %c0_85 = arith.constant 0 : index
      %c0_86 = arith.constant 0 : index
      %318 = vector.load %arg7[%c0_84, %c0_85, %c0_86] : memref<1x8x128xf32, #tpu.memory_space<vmem>>, vector<1x8x128xf32>
      %319 = vector.shape_cast %318 : vector<1x8x128xf32> to vector<8x128xf32>
      %320 = vector.shape_cast %317 : vector<8x128xf32> to vector<1x8x128xf32>
      tpu.vector_store %arg7[%c0_84, %c0_85, %c0_86], %320 {strides = array<i32>} : memref<1x8x128xf32, #tpu.memory_space<vmem>>, vector<1x8x128xf32>,
    } else {
    }
    return
  }
  func.func @transform_0(%arg0: i32, %arg1: i32) -> (i32, i32, i32) {
    %c0_i32 = arith.constant 0 : i32
    %c0_i32_0 = arith.constant 0 : i32
    return %arg0, %c0_i32, %arg1 : i32, i32, i32
  }
  func.func @transform_1(%arg0: i32, %arg1: i32) -> (i32, i32, i32) {
    %c0_i32 = arith.constant 0 : i32
    %c0_i32_0 = arith.constant 0 : i32
    return %arg0, %c0_i32, %arg1 : i32, i32, i32
  }
  func.func @transform_2(%arg0: i32, %arg1: i32) -> (i32, i32) {
    %c0_i32 = arith.constant 0 : i32
    %c0_i32_0 = arith.constant 0 : i32
    return %c0_i32, %arg1 : i32, i32
  }
  func.func @transform_3(%arg0: i32, %arg1: i32) -> (i32, i32, i32) {
    %c0_i32 = arith.constant 0 : i32
    %c0_i32_0 = arith.constant 0 : i32
    %c0_i32_1 = arith.constant 0 : i32
    return %arg0, %c0_i32, %c0_i32_0 : i32, i32, i32
  }
  func.func @transform_4(%arg0: i32, %arg1: i32) -> (i32, i32, i32) {
    %c0_i32 = arith.constant 0 : i32
    %c0_i32_0 = arith.constant 0 : i32
    %c0_i32_1 = arith.constant 0 : i32
    return %arg0, %c0_i32, %c0_i32_0 : i32, i32, i32
  }
  func.func @transform_5(%arg0: i32, %arg1: i32) -> (i32, i32, i32) {
    %c0_i32 = arith.constant 0 : i32
    %c0_i32_0 = arith.constant 0 : i32
    %c0_i32_1 = arith.constant 0 : i32
    return %arg0, %c0_i32, %c0_i32_0 : i32, i32, i32
  }
}

</mosaic_0001>

<llo_original>
// kernel: tpu_custom_call.1
$region0: #{tpu_custom_call.1}
  #allocation0 [shape = 'u32[]', space=smem, size = 0x4, offset = 0x4, fixed_abs, tag = 'smem constant byte address 0x4 - core index']
  #allocation1 [shape = 'u32[144,128]{1,0:T(1,128)}', space=vmem, size = 0x12000, scoped, tag = 'internal scratch']
  #allocation2 [shape = 'f32[8,128]{1,0:T(8,128)}', space=vmem, size = 0x1000, scoped, tag = 'scratch operand']
  %s0 = inlined_call_operand.hbm [shape: f32[2,8,512], index: 0, kind: input, shape index: {}]
  %s1 = inlined_call_operand.hbm [shape: f32[2,4,512], index: 1, kind: input, shape index: {}]
  %s2 = inlined_call_operand.hbm [shape: f32[16,512], index: 2, kind: input, shape index: {}]
  %s3 = inlined_call_operand.hbm [shape: f32[2,8,8], index: 3, kind: input, shape index: {}]
  %s4 = inlined_call_operand.hbm [shape: f32[2,8,8], index: 4, kind: input, shape index: {}]
  %s5 = inlined_call_operand.hbm [shape: f32[2,8,128], index: 5, kind: output, shape index: {}]
  %s6 = sld [smem:[#allocation0]]
  $region81: #{tpu_custom_call.1} parent=0
    _
  %s8 = ssub.s32 1, %s6
  %s9 = scalar_select 0, %s8, %s6
  $region1: #{tpu_custom_call.1} parent=0
    #allocation3 [shape = 'u8[8192]{0}', space=vmem, size = 0x2000, scoped, tag = 'input window, operand 0']
    #allocation4 [shape = 's32[2]{0}', space=sflag, size = 0x8, scoped, tag = 'scoped memory for tpu_custom_call.1']
    #allocation5 [shape = 's32[2]{0}', space=sflag, size = 0x8, scoped, tag = 'scoped memory for tpu_custom_call.1']
    #allocation6 [shape = 'u8[4096]{0}', space=vmem, size = 0x1000, scoped, tag = 'input window, operand 1']
    #allocation7 [shape = 's32[2]{0}', space=sflag, size = 0x8, scoped, tag = 'scoped memory for tpu_custom_call.1']
    #allocation8 [shape = 'u8[16384]{0}', space=vmem, size = 0x4000, scoped, tag = 'input window, operand 2']
    #allocation9 [shape = 'u8[8192]{0}', space=vmem, size = 0x2000, scoped, tag = 'input window, operand 3']
    #allocation10 [shape = 's32[2]{0}', space=sflag, size = 0x8, scoped, tag = 'scoped memory for tpu_custom_call.1']
    #allocation11 [shape = 'u8[8192]{0}', space=vmem, size = 0x2000, scoped, tag = 'input window, operand 4']
    #allocation12 [shape = 'u8[8192]{0}', space=vmem, size = 0x2000, scoped, tag = 'output window, operand 0']
    %10 = vsyncpa [#allocation4], 0
    %s11 = scalar_lea.sflag [#allocation4], 1
    %12 = vsyncpa %s11, 0
    %13 = vsyncpa [#allocation7], 0
    %s14 = scalar_lea.sflag [#allocation7], 1
    %15 = vsyncpa %s14, 0
    %16 = vsyncpa [#allocation10], 0
    %s17 = scalar_lea.sflag [#allocation10], 1
    %18 = vsyncpa %s17, 0
    %19 = vsyncpa [#allocation5], 0
    %s20 = scalar_lea.sflag [#allocation5], 1
    %21 = vsyncpa %s20, 0
    loop: start=0, step=1, limit=10
    $region2: #{tpu_custom_call.1} parent=1 // loop_pre_header
      _
    $region3: #{tpu_custom_call.1} parent=1 // loop_header
      %s23 = sphi 0, %s27
      %p24 = scmp.ge.s32.totalorder %s23, 10
      %s30 = sphi 0, %s42
      %s31 = sphi 0, %s38
      %s32 = sphi 0, %s30
      %s33 = sphi 0, %s31
      %s34 = sphi 0, %s32
      %s35 = sphi 0, %s33
      %s47 = sphi 0, %s49
      %s50 = sphi 0, %s47
      %s51 = sphi 0, %s50
      %s67 = sphi 0, %s51
      %s75 = sphi 0, %s77
      %s78 = sphi 0, %s75
      %s79 = sphi 0, %s78
      %s95 = sphi 0, %s79
      %s101 = sphi 0, %s103
      %s104 = sphi 0, %s101
      %s105 = sphi 0, %s104
      %s121 = sphi 0, %s105
      %s127 = sphi 0, %s129
      %s130 = sphi 0, %s127
      %s131 = sphi 0, %s130
      %s147 = sphi 0, %s131
      %s153 = sphi 0, %s155
      %s156 = sphi 0, %s153
      %s157 = sphi 0, %s156
      %s173 = sphi 0, %s157
      %s179 = sphi 0, %s181
      %s182 = sphi 0, %s179
      %s183 = sphi 0, %s182
      %s199 = sphi 0, %s183
    $region4: #{tpu_custom_call.1} parent=1 // loop_header_branch
      %26 = sbr.rel (%p24) target = $region8
    $region5: #{tpu_custom_call.1} parent=1 // loop_body
      %s28 = ssub.s32 %s23, 1
      %s29 = ssub.s32 %s23, 2
      %s36 = sadd.s32 1, %s31
      %p37 = scmp.ge.s32.totalorder %s36, 4
      %s38 = scalar_select %p37, 0, %s36
      %s39 = sadd.s32 1, %s30
      %s40 = scalar_select %p37, %s39, %s30
      %p41 = scmp.ge.s32.totalorder %s40, 2
      %s42 = scalar_select %p41, 0, %s40
      %s43 = ssub.s32 %s30, %s42
      %s44 = ssub.s32 %s31, %s38
      %s45 = sor.u32 %s43, %s44
      %p46 = scmp.eq.s32.totalorder %s45, 0
      %s48 = sadd.s32 %s47, 1
      %s49 = scalar_select %p46, %s47, %s48
      %p52 = pneg %p46
      %p53 = scmp.eq.s32.totalorder %s23, 7
      %p54 = por %p52, %p53
      %p55 = scmp.ne.s32.totalorder %s47, %s50
      %p56 = scmp.eq.s32.totalorder %s23, 0
      %p57 = por %p55, %p56
      %p58 = scmp.ne.s32.totalorder %s47, %s50
      %p59 = scmp.eq.s32.totalorder %s28, 7
      %p60 = por %p58, %p59
      %p61 = scmp.ne.s32.totalorder %s50, %s51
      %p62 = scmp.eq.s32.totalorder %s28, 0
      %p63 = por %p61, %p62
      %p64 = scmp.ne.s32.totalorder %s50, %s51
      %p65 = scmp.eq.s32.totalorder %s29, 7
      %p66 = por %p64, %p65
      %p68 = scmp.ne.s32.totalorder %s51, %s67
      %p69 = scmp.eq.s32.totalorder %s29, 0
      %p70 = por %p68, %p69
      %s71 = ssub.s32 %s30, %s42
      %s72 = ssub.s32 %s31, %s38
      %s73 = sor.u32 %s71, %s72
      %p74 = scmp.eq.s32.totalorder %s73, 0
      %s76 = sadd.s32 %s75, 1
      %s77 = scalar_select %p74, %s75, %s76
      %p80 = pneg %p74
      %p81 = scmp.eq.s32.totalorder %s23, 7
      %p82 = por %p80, %p81
      %p83 = scmp.ne.s32.totalorder %s75, %s78
      %p84 = scmp.eq.s32.totalorder %s23, 0
      %p85 = por %p83, %p84
      %p86 = scmp.ne.s32.totalorder %s75, %s78
      %p87 = scmp.eq.s32.totalorder %s28, 7
      %p88 = por %p86, %p87
      %p89 = scmp.ne.s32.totalorder %s78, %s79
      %p90 = scmp.eq.s32.totalorder %s28, 0
      %p91 = por %p89, %p90
      %p92 = scmp.ne.s32.totalorder %s78, %s79
      %p93 = scmp.eq.s32.totalorder %s29, 7
      %p94 = por %p92, %p93
      %p96 = scmp.ne.s32.totalorder %s79, %s95
      %p97 = scmp.eq.s32.totalorder %s29, 0
      %p98 = por %p96, %p97
      %s99 = ssub.s32 %s31, %s38
      %p100 = scmp.eq.s32.totalorder %s99, 0
      %s102 = sadd.s32 %s101, 1
      %s103 = scalar_select %p100, %s101, %s102
      %p106 = pneg %p100
      %p107 = scmp.eq.s32.totalorder %s23, 7
      %p108 = por %p106, %p107
      %p109 = scmp.ne.s32.totalorder %s101, %s104
      %p110 = scmp.eq.s32.totalorder %s23, 0
      %p111 = por %p109, %p110
      %p112 = scmp.ne.s32.totalorder %s101, %s104
      %p113 = scmp.eq.s32.totalorder %s28, 7
      %p114 = por %p112, %p113
      %p115 = scmp.ne.s32.totalorder %s104, %s105
      %p116 = scmp.eq.s32.totalorder %s28, 0
      %p117 = por %p115, %p116
      %p118 = scmp.ne.s32.totalorder %s104, %s105
      %p119 = scmp.eq.s32.totalorder %s29, 7
      %p120 = por %p118, %p119
      %p122 = scmp.ne.s32.totalorder %s105, %s121
      %p123 = scmp.eq.s32.totalorder %s29, 0
      %p124 = por %p122, %p123
      %s125 = ssub.s32 %s30, %s42
      %p126 = scmp.eq.s32.totalorder %s125, 0
      %s128 = sadd.s32 %s127, 1
      %s129 = scalar_select %p126, %s127, %s128
      %p132 = pneg %p126
      %p133 = scmp.eq.s32.totalorder %s23, 7
      %p134 = por %p132, %p133
      %p135 = scmp.ne.s32.totalorder %s127, %s130
      %p136 = scmp.eq.s32.totalorder %s23, 0
      %p137 = por %p135, %p136
      %p138 = scmp.ne.s32.totalorder %s127, %s130
      %p139 = scmp.eq.s32.totalorder %s28, 7
      %p140 = por %p138, %p139
      %p141 = scmp.ne.s32.totalorder %s130, %s131
      %p142 = scmp.eq.s32.totalorder %s28, 0
      %p143 = por %p141, %p142
      %p144 = scmp.ne.s32.totalorder %s130, %s131
      %p145 = scmp.eq.s32.totalorder %s29, 7
      %p146 = por %p144, %p145
      %p148 = scmp.ne.s32.totalorder %s131, %s147
      %p149 = scmp.eq.s32.totalorder %s29, 0
      %p150 = por %p148, %p149
      %s151 = ssub.s32 %s30, %s42
      %p152 = scmp.eq.s32.totalorder %s151, 0
      %s154 = sadd.s32 %s153, 1
      %s155 = scalar_select %p152, %s153, %s154
      %p158 = pneg %p152
      %p159 = scmp.eq.s32.totalorder %s23, 7
      %p160 = por %p158, %p159
      %p161 = scmp.ne.s32.totalorder %s153, %s156
      %p162 = scmp.eq.s32.totalorder %s23, 0
      %p163 = por %p161, %p162
      %p164 = scmp.ne.s32.totalorder %s153, %s156
      %p165 = scmp.eq.s32.totalorder %s28, 7
      %p166 = por %p164, %p165
      %p167 = scmp.ne.s32.totalorder %s156, %s157
      %p168 = scmp.eq.s32.totalorder %s28, 0
      %p169 = por %p167, %p168
      %p170 = scmp.ne.s32.totalorder %s156, %s157
      %p171 = scmp.eq.s32.totalorder %s29, 7
      %p172 = por %p170, %p171
      %p174 = scmp.ne.s32.totalorder %s157, %s173
      %p175 = scmp.eq.s32.totalorder %s29, 0
      %p176 = por %p174, %p175
      %s177 = ssub.s32 %s30, %s42
      %p178 = scmp.eq.s32.totalorder %s177, 0
      %s180 = sadd.s32 %s179, 1
      %s181 = scalar_select %p178, %s179, %s180
      %p184 = pneg %p178
      %p185 = scmp.eq.s32.totalorder %s23, 7
      %p186 = por %p184, %p185
      %p187 = scmp.ne.s32.totalorder %s179, %s182
      %p188 = scmp.eq.s32.totalorder %s23, 0
      %p189 = por %p187, %p188
      %p190 = scmp.ne.s32.totalorder %s179, %s182
      %p191 = scmp.eq.s32.totalorder %s28, 7
      %p192 = por %p190, %p191
      %p193 = scmp.ne.s32.totalorder %s182, %s183
      %p194 = scmp.eq.s32.totalorder %s28, 0
      %p195 = por %p193, %p194
      %p196 = scmp.ne.s32.totalorder %s182, %s183
      %p197 = scmp.eq.s32.totalorder %s29, 7
      %p198 = por %p196, %p197
      %p200 = scmp.ne.s32.totalorder %s183, %s199
      %p201 = scmp.eq.s32.totalorder %s29, 0
      %p202 = por %p200, %p201
      %p203 = scmp.le.s32.totalorder 1, %s23
      %p204 = scmp.lt.s32.totalorder %s23, 9
      %p205 = pnand %p203, %p204
      %p206 = pneg %p205
      // Predicated region
      $region9: #{tpu_custom_call.1} parent=5 // pred_check
        _
      $region10: #{tpu_custom_call.1} parent=5 // pred_check_branch
        %208 = sbr.rel (%p205) target = $region12
      $region11: #{tpu_custom_call.1} parent=5 // pred_region
        %s209 = ssub.s32 %s23, 1
      $region12: #{tpu_custom_call.1} parent=5 // pred_fallthru
        _
      %p210 = scmp.lt.s32.totalorder %s23, 8
      // Predicated region
      $region13: #{tpu_custom_call.1} parent=5 // pred_check
        %p211 = pneg %p210
      $region14: #{tpu_custom_call.1} parent=5 // pred_check_branch
        %213 = sbr.rel (%p211) target = $region16
      $region15: #{tpu_custom_call.1} parent=5 // pred_region
        // Predicated region
        $region17: #{tpu_custom_call.1} parent=15 // pred_check
          %p214 = pneg %p57
        $region18: #{tpu_custom_call.1} parent=15 // pred_check_branch
          %216 = sbr.rel (%p214) target = $region20
        $region19: #{tpu_custom_call.1} parent=15 // pred_region
          %s217 = sand.u32 %s47, 1
          %s218 = scalar_lea.sflag [#allocation4], %s217
          %s219 = sand.u32 %s47, 1
          %s220 = smul.addr %s219, 8
          %s221 = scalar_lea.vmem [#allocation3], %s220
          %s223 = ssub.s32 128, 128
          %224 = vsyncadd %s218, %s223
          %s225 = smul.addr %s30, 4
          %s226 = sadd.s32 %s31, %s225
          %s227 = smul.addr %s226, 128
          %s228 = scalar_lea.hbm %s0, %s227
          %s230 = sshll.u32 %s221, 4
          %s231 = int_to_ptr.vmem [resolvable:$true] %s230
          %233 = dma.hbm_to_vmem [thread:$0]  %s228, 128, %s231, %s218
        $region20: #{tpu_custom_call.1} parent=15 // pred_fallthru
          _
        // Predicated region
        $region21: #{tpu_custom_call.1} parent=15 // pred_check
          %p234 = pneg %p85
        $region22: #{tpu_custom_call.1} parent=15 // pred_check_branch
          %236 = sbr.rel (%p234) target = $region24
        $region23: #{tpu_custom_call.1} parent=15 // pred_region
          %s237 = sand.u32 %s23, 1
          %s238 = scalar_lea.sflag [#allocation7], %s237
          %s239 = sand.u32 %s75, 1
          %s240 = smul.addr %s239, 4
          %s241 = scalar_lea.vmem [#allocation6], %s240
          %s243 = ssub.s32 64, 64
          %244 = vsyncadd %s238, %s243
          %s245 = smul.addr %s30, 4
          %s246 = sadd.s32 %s31, %s245
          %s247 = smul.addr %s246, 64
          %s248 = scalar_lea.hbm %s1, %s247
          %s250 = sshll.u32 %s241, 4
          %s251 = int_to_ptr.vmem [resolvable:$true] %s250
          %253 = dma.hbm_to_vmem [thread:$0]  %s248, 64, %s251, %s238
        $region24: #{tpu_custom_call.1} parent=15 // pred_fallthru
          _
        // Predicated region
        $region25: #{tpu_custom_call.1} parent=15 // pred_check
          %p254 = pneg %p111
        $region26: #{tpu_custom_call.1} parent=15 // pred_check_branch
          %256 = sbr.rel (%p254) target = $region28
        $region27: #{tpu_custom_call.1} parent=15 // pred_region
          %s257 = sand.u32 %s23, 1
          %s258 = scalar_lea.sflag [#allocation7], %s257
          %s259 = sand.u32 %s101, 1
          %s260 = smul.addr %s259, 16
          %s261 = scalar_lea.vmem [#allocation8], %s260
          %s263 = ssub.s32 256, 256
          %264 = vsyncadd %s258, %s263
          %s265 = smul.addr %s31, 128
          %s266 = scalar_lea.hbm %s2, %s265
          %s267 = sshll.u32 %s261, 4
          %s268 = int_to_ptr.vmem [resolvable:$true] %s267
          %273 = dma.hbm_to_vmem [thread:$0]  %s266, 256, %s268, %s258, 512, 128, 8
        $region28: #{tpu_custom_call.1} parent=15 // pred_fallthru
          _
        // Predicated region
        $region29: #{tpu_custom_call.1} parent=15 // pred_check
          %p274 = pneg %p137
        $region30: #{tpu_custom_call.1} parent=15 // pred_check_branch
          %276 = sbr.rel (%p274) target = $region32
        $region31: #{tpu_custom_call.1} parent=15 // pred_region
          %s277 = sand.u32 %s23, 1
          %s278 = scalar_lea.sflag [#allocation10], %s277
          %s279 = sand.u32 %s127, 1
          %s280 = smul.addr %s279, 8
          %s281 = scalar_lea.vmem [#allocation9], %s280
          %s283 = ssub.s32 128, 128
          %284 = vsyncadd %s278, %s283
          %s285 = smul.addr %s30, 128
          %s286 = scalar_lea.hbm %s3, %s285
          %s288 = sshll.u32 %s281, 4
          %s289 = int_to_ptr.vmem [resolvable:$true] %s288
          %291 = dma.hbm_to_vmem [thread:$0]  %s286, 128, %s289, %s278
        $region32: #{tpu_custom_call.1} parent=15 // pred_fallthru
          _
        // Predicated region
        $region33: #{tpu_custom_call.1} parent=15 // pred_check
          %p292 = pneg %p163
        $region34: #{tpu_custom_call.1} parent=15 // pred_check_branch
          %294 = sbr.rel (%p292) target = $region36
        $region35: #{tpu_custom_call.1} parent=15 // pred_region
          %s295 = sand.u32 %s23, 1
          %s296 = scalar_lea.sflag [#allocation10], %s295
          %s297 = sand.u32 %s153, 1
          %s298 = smul.addr %s297, 8
          %s299 = scalar_lea.vmem [#allocation11], %s298
          %s301 = ssub.s32 128, 128
          %302 = vsyncadd %s296, %s301
          %s303 = smul.addr %s30, 128
          %s304 = scalar_lea.hbm %s4, %s303
          %s306 = sshll.u32 %s299, 4
          %s307 = int_to_ptr.vmem [resolvable:$true] %s306
          %309 = dma.hbm_to_vmem [thread:$0]  %s304, 128, %s307, %s296
        $region36: #{tpu_custom_call.1} parent=15 // pred_fallthru
          _
      $region16: #{tpu_custom_call.1} parent=5 // pred_fallthru
        _
      %p310 = scmp.le.s32.totalorder 1, %s23
      %p311 = scmp.lt.s32.totalorder %s23, 9
      %p312 = pnand %p310, %p311
      %p313 = pneg %p312
      // Predicated region
      $region37: #{tpu_custom_call.1} parent=5 // pred_check
        _
      $region38: #{tpu_custom_call.1} parent=5 // pred_check_branch
        %315 = sbr.rel (%p312) target = $region40
      $region39: #{tpu_custom_call.1} parent=5 // pred_region
        %s316 = ssub.s32 %s23, 1
        %s317 = sand.u32 %s50, 1
        %s318 = scalar_lea.sflag [#allocation4], %s317
        %s319 = sand.u32 %s50, 1
        %s320 = smul.addr %s319, 8
        %s321 = scalar_lea.vmem [#allocation3], %s320
        // Predicated region
        $region41: #{tpu_custom_call.1} parent=39 // pred_check
          %p322 = pneg %p63
        $region42: #{tpu_custom_call.1} parent=39 // pred_check_branch
          %324 = sbr.rel (%p322) target = $region44
        $region43: #{tpu_custom_call.1} parent=39 // pred_region
          %325 = dma.done %s318, 128
        $region44: #{tpu_custom_call.1} parent=39 // pred_fallthru
          _
        %s326 = sand.u32 %s28, 1
        %s327 = scalar_lea.sflag [#allocation7], %s326
        %s328 = sand.u32 %s78, 1
        %s329 = smul.addr %s328, 4
        %s330 = scalar_lea.vmem [#allocation6], %s329
        // Predicated region
        $region45: #{tpu_custom_call.1} parent=39 // pred_check
          %p331 = pneg %p91
        $region46: #{tpu_custom_call.1} parent=39 // pred_check_branch
          %333 = sbr.rel (%p331) target = $region48
        $region47: #{tpu_custom_call.1} parent=39 // pred_region
          %334 = dma.done %s327, 64
        $region48: #{tpu_custom_call.1} parent=39 // pred_fallthru
          _
        %s335 = sand.u32 %s28, 1
        %s336 = scalar_lea.sflag [#allocation7], %s335
        %s337 = sand.u32 %s104, 1
        %s338 = smul.addr %s337, 16
        %s339 = scalar_lea.vmem [#allocation8], %s338
        // Predicated region
        $region49: #{tpu_custom_call.1} parent=39 // pred_check
          %p340 = pneg %p117
        $region50: #{tpu_custom_call.1} parent=39 // pred_check_branch
          %342 = sbr.rel (%p340) target = $region52
        $region51: #{tpu_custom_call.1} parent=39 // pred_region
          %343 = dma.done %s336, 256
        $region52: #{tpu_custom_call.1} parent=39 // pred_fallthru
          _
        %s344 = sand.u32 %s28, 1
        %s345 = scalar_lea.sflag [#allocation10], %s344
        %s346 = sand.u32 %s130, 1
        %s347 = smul.addr %s346, 8
        %s348 = scalar_lea.vmem [#allocation9], %s347
        // Predicated region
        $region53: #{tpu_custom_call.1} parent=39 // pred_check
          %p349 = pneg %p143
        $region54: #{tpu_custom_call.1} parent=39 // pred_check_branch
          %351 = sbr.rel (%p349) target = $region56
        $region55: #{tpu_custom_call.1} parent=39 // pred_region
          %352 = dma.done %s345, 128
        $region56: #{tpu_custom_call.1} parent=39 // pred_fallthru
          _
        %s353 = sand.u32 %s28, 1
        %s354 = scalar_lea.sflag [#allocation10], %s353
        %s355 = sand.u32 %s156, 1
        %s356 = smul.addr %s355, 8
        %s357 = scalar_lea.vmem [#allocation11], %s356
        // Predicated region
        $region57: #{tpu_custom_call.1} parent=39 // pred_check
          %p358 = pneg %p169
        $region58: #{tpu_custom_call.1} parent=39 // pred_check_branch
          %360 = sbr.rel (%p358) target = $region60
        $region59: #{tpu_custom_call.1} parent=39 // pred_region
          %361 = dma.done %s354, 128
        $region60: #{tpu_custom_call.1} parent=39 // pred_fallthru
          _
        %s362 = sand.u32 %s50, 1
        %s363 = scalar_lea.sflag [#allocation4], %s362
        %s364 = sand.u32 %s50, 1
        %s365 = smul.addr %s364, 8
        %s366 = scalar_lea.vmem [#allocation3], %s365
        %p367 = pneg %p63
        %p368 = pneg %p60
        %s369 = sand.u32 %s28, 1
        %s370 = scalar_lea.sflag [#allocation7], %s369
        %s371 = sand.u32 %s78, 1
        %s372 = smul.addr %s371, 4
        %s373 = scalar_lea.vmem [#allocation6], %s372
        %p374 = pneg %p91
        %p375 = pneg %p88
        %s376 = sand.u32 %s28, 1
        %s377 = scalar_lea.sflag [#allocation7], %s376
        %s378 = sand.u32 %s104, 1
        %s379 = smul.addr %s378, 16
        %s380 = scalar_lea.vmem [#allocation8], %s379
        %p381 = pneg %p117
        %p382 = pneg %p114
        %s383 = sand.u32 %s28, 1
        %s384 = scalar_lea.sflag [#allocation10], %s383
        %s385 = sand.u32 %s130, 1
        %s386 = smul.addr %s385, 8
        %s387 = scalar_lea.vmem [#allocation9], %s386
        %p388 = pneg %p143
        %p389 = pneg %p140
        %s390 = sand.u32 %s28, 1
        %s391 = scalar_lea.sflag [#allocation10], %s390
        %s392 = sand.u32 %s156, 1
        %s393 = smul.addr %s392, 8
        %s394 = scalar_lea.vmem [#allocation11], %s393
        %p395 = pneg %p169
        %p396 = pneg %p166
        %p397 = pneg %p195
        %p398 = pneg %p192
        %s399 = sand.u32 %s182, 1
        %s400 = scalar_lea.sflag [#allocation5], %s399
        %s401 = sand.u32 %s182, 1
        %s402 = smul.addr %s401, 8
        %s403 = scalar_lea.vmem [#allocation12], %s402
        %v404 = vld [vmem:[%s321] sm:$0xff]
        %v405 = vld [vmem:[%s330] sm:$0xf]
        %v406 = vld [vmem:[%s339] sm:$0xff]
        %v407 = vld [vmem:[%s339 + $0x8] sm:$0xff]
        %v408 = vld [vmem:[%s348] sm:$0xff]
        %v409 = vld [vmem:[%s357] sm:$0xff]
        %p410 = scmp.eq.s32.totalorder %s33, 0
        // Predicated region
        $region61: #{tpu_custom_call.1} parent=39 // pred_check
          %p411 = pneg %p410
        $region62: #{tpu_custom_call.1} parent=39 // pred_check_branch
          %413 = sbr.rel (%p411) target = $region64
        $region63: #{tpu_custom_call.1} parent=39 // pred_region
          %414 = vst [vmem:[#allocation2] sm:$0xff] 0.0
        $region64: #{tpu_custom_call.1} parent=39 // pred_fallthru
          _
        %vm415 = vcmp.ne.f32.partialorder %v408, -1.0
        %v416 = vlaneseq
        %v417 = vshrl.u32 %v416, 7
        %v418 = vsub.s32 0, %v417
        %v419 = vrot.slane %v406, %v418
        %421 = vset.pattern.permute.xlu0 0
        %422 = vperm.xlu0 %421, %v408
        %v423 = vpop.permute.xlu0 %422
        %v425 = vmax.f32 %v419, %v423
        %v426 = vlaneseq
        %v427 = vshrl.u32 %v426, 7
        %v428 = vsub.s32 1, %v427
        %v429 = vrot.slane %v406, %v428
        %430 = vset.pattern.permute.xlu0 1
        %431 = vperm.xlu0 %430, %v408
        %v432 = vpop.permute.xlu0 %431
        %v434 = vmax.f32 %v429, %v432
        %v435 = vlaneseq
        %v436 = vshrl.u32 %v435, 7
        %v437 = vsub.s32 2, %v436
        %v438 = vrot.slane %v406, %v437
        %439 = vset.pattern.permute.xlu0 2
        %440 = vperm.xlu0 %439, %v408
        %v441 = vpop.permute.xlu0 %440
        %v443 = vmin.f32 %v438, %v441
        %v444 = vlaneseq
        %v445 = vshrl.u32 %v444, 7
        %v446 = vsub.s32 3, %v445
        %v447 = vrot.slane %v406, %v446
        %448 = vset.pattern.permute.xlu0 3
        %449 = vperm.xlu0 %448, %v408
        %v450 = vpop.permute.xlu0 %449
        %v452 = vmin.f32 %v447, %v450
        %v453 = vsub.f32 %v443, %v425
        %v454 = vmax.f32 %v453, 0.0
        %v455 = vsub.f32 %v452, %v434
        %v456 = vmax.f32 %v455, 0.0
        %v457 = vmul.f32 %v454, %v456
        %458 = vrot.lane.b32.xlu0 %v408, 2
        %v459 = vpop.permute.xlu0 %458
        %v461 = vsub.f32 %v408, %v459
        %463 = vrot.lane.b32.xlu0 %v461, 127
        %v464 = vpop.permute.xlu0 %463
        %v466 = vmul.f32 %v461, %v464
        %v467 = vlaneseq
        %v468 = vshrl.u32 %v467, 7
        %v469 = vsub.s32 4, %v468
        %v470 = vrot.slane %v406, %v469
        %472 = vset.pattern.permute.xlu0 2
        %473 = vperm.xlu0 %472, %v466
        %v474 = vpop.permute.xlu0 %473
        %v476 = vadd.f32 %v470, %v474
        %v477 = vsub.f32 %v476, %v457
        %v478 = vadd.f32 %v477, 1e-08
        %v479 = vrcp.pop %v478
        %v480 = vmul.f32 %v457, %v479
        %v481 = vsel %vm415, 1, 0
        %482 = vset.pattern.permute.xlu0 4
        %483 = vperm.xlu0 %482, %v481
        %v484 = vpop.permute.xlu0 %483
        %vm485 = vcmp.eq.s32.totalorder %v484, 1
        %v486 = vsel %vm485, %v480, -1.0
        %v487 = vrot.slane %v486, 4
        %v488 = vmax.f32 %v486, %v487
        %v489 = vrot.slane %v488, 2
        %v490 = vmax.f32 %v488, %v489
        %v491 = vrot.slane %v490, 1
        %v492 = vmax.f32 %v490, %v491
        %v493 = vlaneseq
        %v494 = vshrl.u32 %v493, 7
        %vm495 = vcmp.eq.f32.partialorder %v486, %v492
        %v496 = vsel %vm495, %v494, 8
        %v497 = vrot.slane %v496, 4
        %vm498 = vcmp.lt.s32.totalorder %v496, %v497
        %v499 = vsel %vm498, %v496, %v497
        %v500 = vrot.slane %v499, 2
        %vm501 = vcmp.lt.s32.totalorder %v499, %v500
        %v502 = vsel %vm501, %v499, %v500
        %v503 = vrot.slane %v502, 1
        %vm504 = vcmp.lt.s32.totalorder %v502, %v503
        %v505 = vsel %vm504, %v502, %v503
        %vm506 = vcmp.eq.s32.totalorder %v494, %v505
        %v507 = vsel %vm506, 1, 0
        %v508 = vcvt.s32.f32 %v507
        %vm509 = vcmp.ge.f32.partialorder %v492, 0.5
        %vm510 = vcmp.ge.f32.partialorder %v492, 0.4
        %vm511 = vmxor %vm509, 1
        %vm512 = vmand %vm510, %vm511
        %vm513 = vcmask 64512
        %v515 = vsel %vm513, %v409, 0
        %517 = vmatprep.subr.mxu0 0.0
        %518 = vmatpush1.msra.mxu0 %v508
        %519 = vmatprep.subr.mxu0 0.0
        %520 = vmatpush1.msra.mxu0 0.0
        %521 = vmatprep.subr.mxu0 0.0
        %522 = vmatpush1.msra.mxu0 0.0
        %523 = vmatprep.subr.mxu0 0.0
        %524 = vmatpush1.msra.mxu0 0.0
        %525 = vmatprep.subr.mxu0 0.0
        %526 = vmatpush1.msra.mxu0 0.0
        %527 = vmatprep.subr.mxu0 0.0
        %528 = vmatpush1.msra.mxu0 0.0
        %529 = vmatprep.subr.mxu0 0.0
        %530 = vmatpush1.msra.mxu0 0.0
        %531 = vmatprep.subr.mxu0 0.0
        %532 = vmatpush1.msra.mxu0 0.0
        %533 = vmatprep.subr.mxu0 0.0
        %534 = vmatpush1.msra.mxu0 0.0
        %535 = vmatprep.subr.mxu0 0.0
        %536 = vmatpush1.msra.mxu0 0.0
        %537 = vmatprep.subr.mxu0 0.0
        %538 = vmatpush1.msra.mxu0 0.0
        %539 = vmatprep.subr.mxu0 0.0
        %540 = vmatpush1.msra.mxu0 0.0
        %541 = vmatprep.subr.mxu0 0.0
        %542 = vmatpush1.msra.mxu0 0.0
        %543 = vmatprep.subr.mxu0 0.0
        %544 = vmatpush1.msra.mxu0 0.0
        %545 = vmatprep.subr.mxu0 0.0
        %546 = vmatpush1.msra.mxu0 0.0
        %547 = vmatprep.subr.mxu0 0.0
        %548 = vmatpush1.msra.mxu0 0.0
        %549 = vmatprep.subr.mxu0 0.0
        %550 = vmatpush1.msra.mxu0 0.0
        %551 = vmatprep.subr.mxu0 0.0
        %552 = vmatpush1.msra.mxu0 0.0
        %553 = vmatprep.subr.mxu0 0.0
        %554 = vmatpush1.msra.mxu0 0.0
        %555 = vmatprep.subr.mxu0 0.0
        %556 = vmatpush1.msra.mxu0 0.0
        %557 = vmatprep.subr.mxu0 0.0
        %558 = vmatpush1.msra.mxu0 0.0
        %559 = vmatprep.subr.mxu0 0.0
        %560 = vmatpush1.msra.mxu0 0.0
        %561 = vmatprep.subr.mxu0 0.0
        %562 = vmatpush1.msra.mxu0 0.0
        %563 = vmatprep.subr.mxu0 0.0
        %564 = vmatpush1.msra.mxu0 0.0
        %565 = vmatprep.subr.mxu0 0.0
        %566 = vmatpush1.msra.mxu0 0.0
        %567 = vmatprep.subr.mxu0 0.0
        %568 = vmatpush1.msra.mxu0 0.0
        %569 = vmatprep.subr.mxu0 0.0
        %570 = vmatpush1.msra.mxu0 0.0
        %571 = vmatprep.subr.mxu0 0.0
        %572 = vmatpush1.msra.mxu0 0.0
        %573 = vmatprep.subr.mxu0 0.0
        %574 = vmatpush1.msra.mxu0 0.0
        %575 = vmatprep.subr.mxu0 0.0
        %576 = vmatpush1.msra.mxu0 0.0
        %577 = vmatprep.subr.mxu0 0.0
        %578 = vmatpush1.msra.mxu0 0.0
        %579 = vmatprep.subr.mxu0 0.0
        %580 = vmatpush1.msra.mxu0 0.0
        %581 = vmatprep.mubr.f32.mxu0 0.0
        %582 = vmatmul.mubr.f32.gmra.mrb[0].mxu0 %v515
        %v583 = vpop.f32.mrb[0].mxu0
        %v584 = vadd.f32 0.0, %v583
        %v585 = vpop.f32.mrb[0].mxu0
        %586 = vdwg.mxu0
        %v588 = vrot.slane %v584, 6
        %v590 = vsub.f32 %v584, %v588
        %v592 = vrot.slane %v590, 1
        %v594 = vmul.f32 %v590, %v592
        %v595 = vmax.f32 %v594, 1e-08
        %v596 = vrsqrt.pop %v595
        %v597 = vmul.f32 %v596, 4.0
        %v598 = vsel %vm509, 1, 0
        %v599 = vcvt.s32.f32 %v598
        %v600 = vmul.f32 %v599, %v407
        %v601 = vsel %vm512, 1, 0
        %v602 = vcvt.s32.f32 %v601
        %v603 = vsub.f32 1.0, %v602
        %v604 = vmul.f32 %v603, %v407
        %v605 = vsel %vm509, %v584, 0.0
        %v606 = vcvt.f32.s32.to.zero.pseudo %v605
        %v607 = vmul.f32 %v600, %v597
        %v608 = vlaneseq
        %v609 = vshrl.u32 %v608, 7
        %v610 = vsub.s32 0, %v609
        %v611 = vrot.slane %v606, %v610
        %vm612 = vcmp.eq.s32.totalorder %v494, %v611
        %v613 = vsel %vm612, 1, 0
        %v614 = vcvt.s32.f32 %v613
        %v615 = vlaneseq
        %v616 = vshrl.u32 %v615, 7
        %v617 = vsub.s32 3, %v616
        %v618 = vrot.slane %v607, %v617
        %v619 = vmul.f32 %v618, %v614
        %v620 = vsub.f32 %v404, %v619
        %v621 = vrot.slane %v620, 4
        %v622 = vmax.f32 %v620, %v621
        %v623 = vrot.slane %v622, 2
        %v624 = vmax.f32 %v622, %v623
        %v625 = vrot.slane %v624, 1
        %v626 = vmax.f32 %v624, %v625
        %v627 = vsub.f32 %v620, %v626
        %v628 = vmul.f32 %v627, 1.442695
        %v629 = vpow.pop %v628
        %v630 = vrot.slane %v629, 4
        %v631 = vadd.f32 %v629, %v630
        %v632 = vrot.slane %v631, 2
        %v633 = vadd.f32 %v631, %v632
        %v634 = vrot.slane %v633, 1
        %v635 = vadd.f32 %v633, %v634
        %v636 = vlog2.pop %v635
        %v637 = vmul.f32 %v636, 0.6931472
        %v638 = vmul.f32 %v627, %v614
        %v639 = vrot.slane %v638, 4
        %v640 = vadd.f32 %v638, %v639
        %v641 = vrot.slane %v640, 2
        %v642 = vadd.f32 %v640, %v641
        %v643 = vrot.slane %v642, 1
        %v644 = vadd.f32 %v642, %v643
        %v645 = vsub.f32 %v637, %v644
        %v646 = vmul.f32 %v645, %v604
        %v648 = vrot.slane %v646, 3
        %vm650 = vcmask 1040384
        %v651 = vsel %vm650, %v648, 0.0
        %652 = vadd.xlane.f32.xlu0 %v651
        %v653 = vpop.xlane.xlu0 %652
        %v654 = vrot.slane %v653, 4
        %v655 = vadd.f32 %v653, %v654
        %v656 = vrot.slane %v655, 2
        %v657 = vadd.f32 %v655, %v656
        %v658 = vrot.slane %v657, 1
        %v659 = vadd.f32 %v657, %v658
        %s660 = vtos %v659
        %v662 = vrot.slane %v604, 3
        %v664 = vsel %vm650, %v662, 0.0
        %665 = vadd.xlane.f32.xlu0 %v664
        %v666 = vpop.xlane.xlu0 %665
        %v667 = vrot.slane %v666, 4
        %v668 = vadd.f32 %v666, %v667
        %v669 = vrot.slane %v668, 2
        %v670 = vadd.f32 %v668, %v669
        %v671 = vrot.slane %v670, 1
        %v672 = vadd.f32 %v670, %v671
        %s673 = vtos %v672
        %v674 = vmax.f32 %v590, 1e-08
        %v675 = vrot.slane %v584, 2
        %v677 = vadd.f32 %v584, %v675
        %v678 = vmul.f32 %v677, 0.5
        %v680 = vrot.slane %v406, 4
        %v682 = vsub.f32 %v678, %v680
        %v683 = vrot.slane %v406, 6
        %v685 = vmul.f32 %v682, %v683
        %v687 = vrot.slane %v407, 6
        %v689 = vmul.f32 %v682, %v687
        %v690 = vlog2.pop %v674
        %v691 = vmul.f32 %v690, 0.6931472
        %v692 = vsub.f32 %v691, %v687
        %v694 = vrot.slane %v600, 3
        %v696 = vsel %vm650, %v694, 0.0
        %697 = vadd.xlane.f32.xlu0 %v696
        %v698 = vpop.xlane.xlu0 %697
        %v699 = vrot.slane %v698, 4
        %v700 = vadd.f32 %v698, %v699
        %v701 = vrot.slane %v700, 2
        %v702 = vadd.f32 %v700, %v701
        %v703 = vrot.slane %v702, 1
        %v704 = vadd.f32 %v702, %v703
        %s705 = vtos %v704
        %v707 = vrot.slane %v685, 1
        %v709 = vsub.f32 %v405, %v707
        %v710 = vand.u32 2147483647, %v709
        %vm711 = vcmp.lt.f32.partialorder %v710, 1.0
        %v712 = vmul.f32 %v709, 0.5
        %v713 = vmul.f32 %v712, %v709
        %v714 = vsub.f32 %v710, 0.5
        %v715 = vsel %vm711, %v713, %v714
        %v717 = vrot.slane %v715, 5
        %v719 = vmul.f32 %v600, %v717
        %v721 = vrot.slane %v719, 3
        %v723 = vsel %vm650, %v721, 0.0
        %724 = vadd.xlane.f32.xlu0 %v723
        %v725 = vpop.xlane.xlu0 %724
        %v726 = vrot.slane %v725, 4
        %v727 = vadd.f32 %v725, %v726
        %v728 = vrot.slane %v727, 2
        %v729 = vadd.f32 %v727, %v728
        %v730 = vrot.slane %v729, 1
        %v731 = vadd.f32 %v729, %v730
        %s732 = vtos %v731
        %v734 = vrot.slane %v689, 1
        %v736 = vsub.f32 %v405, %v734
        %v737 = vand.u32 2147483647, %v736
        %vm738 = vcmp.lt.f32.partialorder %v737, 1.0
        %v739 = vmul.f32 %v736, 0.5
        %v740 = vmul.f32 %v739, %v736
        %v741 = vsub.f32 %v737, 0.5
        %v742 = vsel %vm738, %v740, %v741
        %v744 = vrot.slane %v742, 6
        %v746 = vmul.f32 %v600, %v744
        %v748 = vrot.slane %v746, 3
        %v750 = vsel %vm650, %v748, 0.0
        %751 = vadd.xlane.f32.xlu0 %v750
        %v752 = vpop.xlane.xlu0 %751
        %v753 = vrot.slane %v752, 4
        %v754 = vadd.f32 %v752, %v753
        %v755 = vrot.slane %v754, 2
        %v756 = vadd.f32 %v754, %v755
        %v757 = vrot.slane %v756, 1
        %v758 = vadd.f32 %v756, %v757
        %s759 = vtos %v758
        %s760 = sadd.f32 %s732, %s759
        %v762 = vrot.slane %v692, 1
        %v764 = vsub.f32 %v405, %v762
        %v765 = vand.u32 2147483647, %v764
        %vm766 = vcmp.lt.f32.partialorder %v765, 1.0
        %v767 = vmul.f32 %v764, 0.5
        %v768 = vmul.f32 %v767, %v764
        %v769 = vsub.f32 %v765, 0.5
        %v770 = vsel %vm766, %v768, %v769
        %v772 = vrot.slane %v770, 7
        %v774 = vmul.f32 %v600, %v772
        %v776 = vrot.slane %v774, 3
        %v778 = vsel %vm650, %v776, 0.0
        %779 = vadd.xlane.f32.xlu0 %v778
        %v780 = vpop.xlane.xlu0 %779
        %v781 = vrot.slane %v780, 4
        %v782 = vadd.f32 %v780, %v781
        %v783 = vrot.slane %v782, 2
        %v784 = vadd.f32 %v782, %v783
        %v785 = vrot.slane %v784, 1
        %v786 = vadd.f32 %v784, %v785
        %s787 = vtos %v786
        %s788 = sadd.f32 %s760, %s787
        %v789 = vmul.f32 %v600, %v770
        %v791 = vrot.slane %v789, 3
        %v793 = vsel %vm650, %v791, 0.0
        %794 = vadd.xlane.f32.xlu0 %v793
        %v795 = vpop.xlane.xlu0 %794
        %v796 = vrot.slane %v795, 4
        %v797 = vadd.f32 %v795, %v796
        %v798 = vrot.slane %v797, 2
        %v799 = vadd.f32 %v797, %v798
        %v800 = vrot.slane %v799, 1
        %v801 = vadd.f32 %v799, %v800
        %s802 = vtos %v801
        %s803 = sadd.f32 %s788, %s802
        %v804 = vlaneseq
        %v805 = vand.u32 %v804, 127
        %vm806 = vcmp.eq.s32.totalorder %v494, 0
        %v807 = vld [vmem:[#allocation2] sm:$0xff]
        %vm808 = vcmp.eq.s32.totalorder %v805, 0
        %vm809 = vmand %vm806, %vm808
        %vm810 = vcmp.eq.s32.totalorder %v805, 1
        %vm811 = vmand %vm806, %vm810
        %vm812 = vcmp.eq.s32.totalorder %v805, 2
        %vm813 = vmand %vm806, %vm812
        %vm814 = vcmp.eq.s32.totalorder %v805, 3
        %vm815 = vmand %vm806, %vm814
        %v816 = vstv %s705
        %v817 = vsel %vm815, %v816, 0.0
        %v818 = vstv %s803
        %v819 = vsel %vm813, %v818, %v817
        %v820 = vstv %s673
        %v821 = vsel %vm811, %v820, %v819
        %v822 = vstv %s660
        %v823 = vsel %vm809, %v822, %v821
        %v824 = vadd.f32 %v807, %v823
        %825 = vst [vmem:[#allocation2] sm:$0xff] %v824
        %p826 = scmp.eq.s32.totalorder %s33, 3
        // Predicated region
        $region65: #{tpu_custom_call.1} parent=39 // pred_check
          %p827 = pneg %p826
        $region66: #{tpu_custom_call.1} parent=39 // pred_check_branch
          %829 = sbr.rel (%p827) target = $region68
        $region67: #{tpu_custom_call.1} parent=39 // pred_region
          %v830 = vld [vmem:[#allocation2] sm:$0xff]
          %v831 = vsel %vm809, %v830, 0.0
          %832 = vadd.xlane.f32.xlu0 %v831
          %v833 = vpop.xlane.xlu0 %832
          %v834 = vrot.slane %v833, 4
          %v835 = vadd.f32 %v833, %v834
          %v836 = vrot.slane %v835, 2
          %v837 = vadd.f32 %v835, %v836
          %v838 = vrot.slane %v837, 1
          %v839 = vadd.f32 %v837, %v838
          %s840 = vtos %v839
          %v841 = vsel %vm811, %v830, 0.0
          %842 = vadd.xlane.f32.xlu0 %v841
          %v843 = vpop.xlane.xlu0 %842
          %v844 = vrot.slane %v843, 4
          %v845 = vadd.f32 %v843, %v844
          %v846 = vrot.slane %v845, 2
          %v847 = vadd.f32 %v845, %v846
          %v848 = vrot.slane %v847, 1
          %v849 = vadd.f32 %v847, %v848
          %s850 = vtos %v849
          %v851 = vsel %vm813, %v830, 0.0
          %852 = vadd.xlane.f32.xlu0 %v851
          %v853 = vpop.xlane.xlu0 %852
          %v854 = vrot.slane %v853, 4
          %v855 = vadd.f32 %v853, %v854
          %v856 = vrot.slane %v855, 2
          %v857 = vadd.f32 %v855, %v856
          %v858 = vrot.slane %v857, 1
          %v859 = vadd.f32 %v857, %v858
          %s860 = vtos %v859
          %v861 = vsel %vm815, %v830, 0.0
          %862 = vadd.xlane.f32.xlu0 %v861
          %v863 = vpop.xlane.xlu0 %862
          %v864 = vrot.slane %v863, 4
          %v865 = vadd.f32 %v863, %v864
          %v866 = vrot.slane %v865, 2
          %v867 = vadd.f32 %v865, %v866
          %v868 = vrot.slane %v867, 1
          %v869 = vadd.f32 %v867, %v868
          %s870 = vtos %v869
          %s871 = smax.f32 %s850, 1.0
          %v872 = vstv %s871
          %v873 = vrcp.pop %v872
          %s874 = vtos %v873
          %s875 = smul.f32 %s840, %s874
          %s876 = smul.f32 %s870, 4.0
          %s877 = smax.f32 %s876, 1.0
          %v878 = vstv %s877
          %v879 = vrcp.pop %v878
          %s880 = vtos %v879
          %s881 = smul.f32 %s860, %s880
          %v882 = vstv %s870
          %v883 = vsel %vm813, %v882, 0.0
          %v884 = vstv %s881
          %v885 = vsel %vm811, %v884, %v883
          %v886 = vstv %s875
          %v887 = vsel %vm809, %v886, %v885
          %888 = vst [vmem:[%s403] sm:$0xff] %v887
        $region68: #{tpu_custom_call.1} parent=39 // pred_fallthru
          _
        %s889 = sand.u32 %s182, 1
        %s890 = scalar_lea.sflag [#allocation5], %s889
        %s891 = sand.u32 %s182, 1
        %s892 = smul.addr %s891, 8
        %s893 = scalar_lea.vmem [#allocation12], %s892
        // Predicated region
        $region69: #{tpu_custom_call.1} parent=39 // pred_check
          %p894 = pneg %p192
        $region70: #{tpu_custom_call.1} parent=39 // pred_check_branch
          %896 = sbr.rel (%p894) target = $region72
        $region71: #{tpu_custom_call.1} parent=39 // pred_region
          %s898 = ssub.s32 128, 128
          %899 = vsyncadd %s890, %s898
          %s900 = smul.addr %s32, 128
          %s901 = scalar_lea.hbm %s5, %s900
          %s903 = sshll.u32 %s893, 4
          %s904 = int_to_ptr.vmem [resolvable:$true] %s903
          %906 = dma.vmem_to_hbm [thread:$0]  %s904, 128, %s901, %s890
        $region72: #{tpu_custom_call.1} parent=39 // pred_fallthru
          _
      $region40: #{tpu_custom_call.1} parent=5 // pred_fallthru
        _
      %p907 = scmp.le.s32.totalorder 2, %s23
      // Predicated region
      $region73: #{tpu_custom_call.1} parent=5 // pred_check
        %p908 = pneg %p907
      $region74: #{tpu_custom_call.1} parent=5 // pred_check_branch
        %910 = sbr.rel (%p908) target = $region76
      $region75: #{tpu_custom_call.1} parent=5 // pred_region
        %s911 = ssub.s32 %s23, 2
        // Predicated region
        $region77: #{tpu_custom_call.1} parent=75 // pred_check
          %p912 = pneg %p198
        $region78: #{tpu_custom_call.1} parent=75 // pred_check_branch
          %914 = sbr.rel (%p912) target = $region80
        $region79: #{tpu_custom_call.1} parent=75 // pred_region
          %s915 = sand.u32 %s183, 1
          %s916 = scalar_lea.sflag [#allocation5], %s915
          %s917 = sand.u32 %s183, 1
          %s918 = smul.addr %s917, 8
          %s919 = scalar_lea.vmem [#allocation12], %s918
          %920 = dma.done %s916, 128
        $region80: #{tpu_custom_call.1} parent=75 // pred_fallthru
          _
      $region76: #{tpu_custom_call.1} parent=5 // pred_fallthru
        _
    $region6: #{tpu_custom_call.1} parent=1 // loop_footer
      %s27 = sadd.s32 1, %s23
    $region7: #{tpu_custom_call.1} parent=1 // loop_footer_branch
      %22 = sbr.rel target = $region3
    $region8: #{tpu_custom_call.1} parent=1 // loop_exit
      _
    %921 = vsyncpa [#allocation4], 1
    %s922 = scalar_lea.sflag [#allocation4], 1
    %923 = vsyncpa %s922, 1
    %924 = vsyncpa [#allocation7], 1
    %s925 = scalar_lea.sflag [#allocation7], 1
    %926 = vsyncpa %s925, 1
    %927 = vsyncpa [#allocation10], 1
    %s928 = scalar_lea.sflag [#allocation10], 1
    %929 = vsyncpa %s928, 1
    %930 = vsyncpa [#allocation5], 1
    %s931 = scalar_lea.sflag [#allocation5], 1
    %932 = vsyncpa %s931, 1

</llo_original>
